<compile_context>
chip_gen: v6e
topology: v6e:2x2x1
jax: 0.10.0
libtpu: 0.0.40
codegen_flags: <defaults>
</compile_context>

<pallas_src>
import functools

import jax
import jax.numpy as jnp
from jax.experimental import pallas as pl
from jax.experimental.pallas import tpu as pltpu


def _round_up(x, m):
    return ((x + m - 1) // m) * m


# ----------------------------- Pallas kernel -------------------------------
def dcnv2_klg_kernel(emb_ref, klg_ref,
                     wc_ref, bc_ref,
                     w1e_ref, w1k_ref, b1_ref,
                     w2_ref, b2_ref,
                     woct_ref, wodt_ref, bo_ref,
                     out_ref):
    x0_lp = emb_ref[...]                                     # (tb, D0) bf16
    x0 = x0_lp.astype(jnp.float32)                           # f32 copy for VPU math

    # ---- deep tower: MLP over concat(emb, klg); concat replaced by split dots ----
    h = (jnp.dot(x0_lp, w1e_ref[...], preferred_element_type=jnp.float32)
         + jnp.dot(klg_ref[...], w1k_ref[...], preferred_element_type=jnp.float32)
         + b1_ref[...])
    h = jnp.maximum(h, 0.0)                                  # (tb, H1) f32
    h = jnp.dot(h.astype(jnp.bfloat16), w2_ref[...],
                preferred_element_type=jnp.float32) + b2_ref[...]
    h = jnp.maximum(h, 0.0)                                  # (tb, H2) f32

    # ---- cross network: x_{l+1} = x0 * (x_l @ W_l + b_l) + x_l (static unroll) ----
    n_cross = wc_ref.shape[0]
    xl = x0
    for i in range(n_cross):                                 # static, fully unrolled
        xl_w = jnp.dot(xl.astype(jnp.bfloat16), wc_ref[i],
                       preferred_element_type=jnp.float32) + bc_ref[i]
        xl = x0 * xl_w + xl                                  # f32 elementwise (tb, D0)

    # ---- predict layer on concat(cross, deep); concat replaced by split reductions ----
    # Weight rows stored as (1, D) so this is a broadcast-multiply + lane reduce
    # (VPU + XLU, f32) producing the (tb, 1) logit directly — no zero-padded columns.
    logit = (jnp.sum(xl * woct_ref[...], axis=-1, keepdims=True)
             + jnp.sum(h * wodt_ref[...], axis=-1, keepdims=True)
             + bo_ref[...])                                  # (tb, 1) f32
    out_ref[...] = jax.nn.sigmoid(logit)


# --------------------- one-time parameter preprocessing ---------------------
def prepare_params(params):
    """Hoist all dtype casts / layout tweaks out of the per-call forward path."""
    return {
        # embedding table in bf16 so the XLA gather intermediate is bf16 too
        "embedding": params["embedding"].astype(jnp.bfloat16),
        # matmul operands in bf16 (MXU), biases stay f32 (added post-accumulation)
        "w_cross": params["w_cross"].astype(jnp.bfloat16),    # (L, D0, D0)
        "b_cross": params["b_cross"].astype(jnp.float32),     # (L, 1, D0)
        "w1_emb": params["w1_emb"].astype(jnp.bfloat16),      # (D0, H1)
        "w1_klg": params["w1_klg"].astype(jnp.bfloat16),      # (KV, H1)
        "b1": params["b1"].astype(jnp.float32),               # (1, H1)
        "w2": params["w2"].astype(jnp.bfloat16),              # (H1, H2)
        "b2": params["b2"].astype(jnp.float32),                # (1, H2)
        # predict layer stored as (1, D) rows; consumed via f32 multiply+reduce
        "wo_cross_t": params["wo_cross"].T.astype(jnp.float32),  # (1, D0)
        "wo_deep_t": params["wo_deep"].T.astype(jnp.float32),    # (1, H2)
        "bo": params["bo"].astype(jnp.float32),                  # (1, 1)
    }


# ------------------------------ wrapper -------------------------------------
def dcnv2_klg_forward(prep, x_user, x_item, x_context, user_hist, hist_len,
                      klg, *, embed_dim, block_b=256):
    # user_hist / hist_len are accepted for API parity with the PyTorch forward,
    # but DCNV2_KLG.forward does not use them.
    del user_hist, hist_len

    emb_table = prep["embedding"]                            # (V, E) bf16
    x = jnp.concatenate([x_user, x_item, x_context], axis=1)  # (B, F) int32
    B, F = x.shape
    E = embed_dim
    D0 = F * E
    KV = klg.shape[1]

    # embedding lookup (glue, outside the kernel) -- bf16 intermediate
    emb = emb_table[x].reshape(B, D0)                        # (B, D0) bf16
    klg = klg.astype(jnp.bfloat16)                           # (B, KV) bf16

    # batch tile: large (amortize grid-step overhead, fill MXU M dim) but clamped to
    # the batch so tiny batches don't over-pad; must stay a multiple of 8 sublanes.
    block_b = max(8, min(_round_up(block_b, 8), _round_up(B, 8)))
    Bp = _round_up(B, block_b)
    if Bp != B:
        emb = jnp.pad(emb, ((0, Bp - B), (0, 0)))
        klg = jnp.pad(klg, ((0, Bp - B), (0, 0)))

    def batch_spec(d):
        return pl.BlockSpec((block_b, d), lambda b: (b, 0))

    def const2(arr):
        return pl.BlockSpec(arr.shape, lambda b: (0, 0))

    def const3(arr):
        return pl.BlockSpec(arr.shape, lambda b: (0, 0, 0))

    grid = (Bp // block_b,)

    out = pl.pallas_call(
        dcnv2_klg_kernel,
        out_shape=jax.ShapeDtypeStruct((Bp, 1), jnp.float32),
        grid=grid,
        in_specs=[
            batch_spec(D0),                  # emb  (streamed, bf16)
            batch_spec(KV),                  # klg  (streamed, bf16)
            const3(prep["w_cross"]),         # (L, D0, D0) resident
            const3(prep["b_cross"]),         # (L, 1, D0)  resident
            const2(prep["w1_emb"]),          # (D0, H1)
            const2(prep["w1_klg"]),          # (KV, H1)
            const2(prep["b1"]),              # (1, H1)
            const2(prep["w2"]),              # (H1, H2)
            const2(prep["b2"]),              # (1, H2)
            const2(prep["wo_cross_t"]),      # (1, D0)
            const2(prep["wo_deep_t"]),       # (1, H2)
            const2(prep["bo"]),              # (1, 1)
        ],
        out_specs=pl.BlockSpec((block_b, 1), lambda b: (b, 0)),
        compiler_params=pltpu.CompilerParams(
            dimension_semantics=("parallel",)),   # batch tiles shard across TCs (v7x)
    )(emb, klg,
      prep["w_cross"], prep["b_cross"],
      prep["w1_emb"], prep["w1_klg"], prep["b1"],
      prep["w2"], prep["b2"],
      prep["wo_cross_t"], prep["wo_deep_t"], prep["bo"])

    return out[:B, 0]


# --------------------------- pure-JAX reference ------------------------------
def dcnv2_klg_reference(params, x_user, x_item, x_context, user_hist, hist_len,
                        klg, *, embed_dim):
    del user_hist, hist_len
    emb_table = params["embedding"]
    x = jnp.concatenate([x_user, x_item, x_context], axis=1)
    B, F = x.shape
    D0 = F * embed_dim
    emb = emb_table[x].reshape(B, D0).astype(jnp.float32)
    klg = klg.astype(jnp.float32)

    # deep tower (matches torch: MLP over concat(emb, klg); dropout identity at eval)
    inp = jnp.concatenate([emb, klg], axis=1)
    w1 = jnp.concatenate([params["w1_emb"], params["w1_klg"]], axis=0)
    h = jnp.maximum(inp @ w1 + params["b1"], 0.0)
    h = jnp.maximum(h @ params["w2"] + params["b2"], 0.0)

    # cross network
    x0 = emb
    xl = x0
    for i in range(params["w_cross"].shape[0]):
        xl_w = xl @ params["w_cross"][i] + params["b_cross"][i]
        xl = x0 * xl_w + xl

    # predict layer on concat(cross, deep)
    concat = jnp.concatenate([xl, h], axis=1)
    wo = jnp.concatenate([params["wo_cross"], params["wo_deep"]], axis=0)
    logit = concat @ wo + params["bo"]
    return jax.nn.sigmoid(logit)[:, 0]


# ------------------------------- main ----------------------------------------
if __name__ == "__main__":
    # small config consistent with the module
    VOCAB = 100
    EMBED_DIM = 8
    USER_F, ITEM_F, CTX_F = 2, 2, 1
    X_FIELDS = USER_F + ITEM_F + CTX_F
    D0 = X_FIELDS * EMBED_DIM                # in_feature_num = 40
    HIDDEN_DIMS = (32, 16)
    CROSS_LAYERS = 3
    KLG_VEC_DIM = 16                         # klg_num_fields * klg_encoder_vec_dim
    B, T, HIST_F = 512, 8, 2                 # 512 rows / 256-row tiles -> 2 grid steps
    BLOCK_B = 256

    key = jax.random.PRNGKey(0)
    ks = jax.random.split(key, 20)

    params = {
        "embedding": 0.1 * jax.random.normal(ks[0], (VOCAB, EMBED_DIM), jnp.float32),
        # cross weights stored transposed vs. PyTorch (row convention: x @ W)
        "w_cross": 0.1 * jax.random.normal(ks[1], (CROSS_LAYERS, D0, D0), jnp.float32),
        "b_cross": 0.1 * jax.random.normal(ks[2], (CROSS_LAYERS, 1, D0), jnp.float32),
        # MLP layer 1 stored row-split: rows for embeddings and rows for klg
        "w1_emb": 0.1 * jax.random.normal(ks[3], (D0, HIDDEN_DIMS[0]), jnp.float32),
        "w1_klg": 0.1 * jax.random.normal(ks[4], (KLG_VEC_DIM, HIDDEN_DIMS[0]), jnp.float32),
        "b1": 0.1 * jax.random.normal(ks[5], (1, HIDDEN_DIMS[0]), jnp.float32),
        "w2": 0.1 * jax.random.normal(ks[6], (HIDDEN_DIMS[0], HIDDEN_DIMS[1]), jnp.float32),
        "b2": 0.1 * jax.random.normal(ks[7], (1, HIDDEN_DIMS[1]), jnp.float32),
        # predict layer stored row-split: rows for cross output and rows for deep output
        "wo_cross": 0.1 * jax.random.normal(ks[8], (D0, 1), jnp.float32),
        "wo_deep": 0.1 * jax.random.normal(ks[9], (HIDDEN_DIMS[1], 1), jnp.float32),
        "bo": 0.1 * jax.random.normal(ks[10], (1, 1), jnp.float32),
    }

    x_user = jax.random.randint(ks[11], (B, USER_F), 0, VOCAB, jnp.int32)
    x_item = jax.random.randint(ks[12], (B, ITEM_F), 0, VOCAB, jnp.int32)
    x_context = jax.random.randint(ks[13], (B, CTX_F), 0, VOCAB, jnp.int32)
    user_hist = jax.random.randint(ks[14], (B, T, HIST_F), 0, VOCAB, jnp.int32)
    hist_len = jax.random.randint(ks[15], (B,), 0, T + 1, jnp.int32)
    klg = 0.1 * jax.random.normal(ks[16], (B, KLG_VEC_DIM), jnp.float32)

    prep = prepare_params(params)            # one-time preprocessing (casts/layout)

    fwd = functools.partial(dcnv2_klg_forward, embed_dim=EMBED_DIM, block_b=BLOCK_B)
    out = jax.block_until_ready(
        fwd(prep, x_user, x_item, x_context, user_hist, hist_len, klg))

    ref = dcnv2_klg_reference(params, x_user, x_item, x_context, user_hist,
                              hist_len, klg, embed_dim=EMBED_DIM)

    assert out.shape == (B,)
    # bf16 streaming / bf16 MXU operands with f32 accumulation: loosened tolerance
    max_err = float(jnp.max(jnp.abs(out - ref)))
    assert max_err < 2e-2, (max_err, out[:8], ref[:8])
    print("KERNEL_OK")
</pallas_src>

<mosaic_0001>
module attributes {stable_mosaic.version = 11 : i64} {
  func.func @dcnv2_klg_kernel(%arg0: i32, %arg1: memref<256x40xbf16, #tpu.memory_space<vmem>>, %arg2: memref<256x16xbf16, #tpu.memory_space<vmem>>, %arg3: memref<3x40x40xbf16, #tpu.memory_space<vmem>>, %arg4: memref<3x1x40xf32, #tpu.memory_space<vmem>>, %arg5: memref<40x32xbf16, #tpu.memory_space<vmem>>, %arg6: memref<16x32xbf16, #tpu.memory_space<vmem>>, %arg7: memref<1x32xf32, #tpu.memory_space<vmem>>, %arg8: memref<32x16xbf16, #tpu.memory_space<vmem>>, %arg9: memref<1x16xf32, #tpu.memory_space<vmem>>, %arg10: memref<1x40xf32, #tpu.memory_space<vmem>>, %arg11: memref<1x16xf32, #tpu.memory_space<vmem>>, %arg12: memref<1x1xf32, #tpu.memory_space<vmem>>, %arg13: memref<256x1xf32, #tpu.memory_space<vmem>>) attributes {dimension_semantics = [#tpu.dimension_semantics<parallel>], iteration_bounds = array<i64: 2>, scalar_prefetch = 0 : i64, scratch_operands = 0 : i64, tpu.core_type = #tpu.core_type<tc>, window_params = [{transform_indices = @transform_0, window_bounds = array<i64: 256, 40>}, {transform_indices = @transform_1, window_bounds = array<i64: 256, 16>}, {pipeline_mode = #tpu.pipeline_mode<synchronous>, transform_indices = @transform_2, window_bounds = array<i64: 3, 40, 40>}, {pipeline_mode = #tpu.pipeline_mode<synchronous>, transform_indices = @transform_3, window_bounds = array<i64: 3, 1, 40>}, {pipeline_mode = #tpu.pipeline_mode<synchronous>, transform_indices = @transform_4, window_bounds = array<i64: 40, 32>}, {pipeline_mode = #tpu.pipeline_mode<synchronous>, transform_indices = @transform_5, window_bounds = array<i64: 16, 32>}, {pipeline_mode = #tpu.pipeline_mode<synchronous>, transform_indices = @transform_6, window_bounds = array<i64: 1, 32>}, {pipeline_mode = #tpu.pipeline_mode<synchronous>, transform_indices = @transform_7, window_bounds = array<i64: 32, 16>}, {pipeline_mode = #tpu.pipeline_mode<synchronous>, transform_indices = @transform_8, window_bounds = array<i64: 1, 16>}, {pipeline_mode = #tpu.pipeline_mode<synchronous>, transform_indices = @transform_9, window_bounds = array<i64: 1, 40>}, {pipeline_mode = #tpu.pipeline_mode<synchronous>, transform_indices = @transform_10, window_bounds = array<i64: 1, 16>}, {pipeline_mode = #tpu.pipeline_mode<synchronous>, transform_indices = @transform_11, window_bounds = array<i64: 1, 1>}, {transform_indices = @transform_12, window_bounds = array<i64: 256, 1>}]} {
    %c0 = arith.constant 0 : index
    %c0_0 = arith.constant 0 : index
    %0 = vector.load %arg1[%c0, %c0_0] : memref<256x40xbf16, #tpu.memory_space<vmem>>, vector<256x40xbf16>
    %1 = arith.extf %0 : vector<256x40xbf16> to vector<256x40xf32>
    %c0_1 = arith.constant 0 : index
    %c0_2 = arith.constant 0 : index
    %2 = vector.load %arg5[%c0_1, %c0_2] : memref<40x32xbf16, #tpu.memory_space<vmem>>, vector<40x32xbf16>
    %cst = arith.constant dense<0.000000e+00> : vector<256x32xf32>
    %3 = tpu.matmul %0, %2, %cst {dimension_numbers = #tpu.dot_dimension_numbers<[1], [0], [0], [1], [0, 0, 1, 1], [], []>} : vector<256x40xbf16>, vector<40x32xbf16>, vector<256x32xf32> -> vector<256x32xf32>
    %c0_3 = arith.constant 0 : index
    %c0_4 = arith.constant 0 : index
    %4 = vector.load %arg2[%c0_3, %c0_4] : memref<256x16xbf16, #tpu.memory_space<vmem>>, vector<256x16xbf16>
    %c0_5 = arith.constant 0 : index
    %c0_6 = arith.constant 0 : index
    %5 = vector.load %arg6[%c0_5, %c0_6] : memref<16x32xbf16, #tpu.memory_space<vmem>>, vector<16x32xbf16>
    %cst_7 = arith.constant dense<0.000000e+00> : vector<256x32xf32>
    %6 = tpu.matmul %4, %5, %cst_7 {dimension_numbers = #tpu.dot_dimension_numbers<[1], [0], [0], [1], [0, 0, 1, 1], [], []>} : vector<256x16xbf16>, vector<16x32xbf16>, vector<256x32xf32> -> vector<256x32xf32>
    %7 = arith.addf %3, %6 : vector<256x32xf32>
    %c0_8 = arith.constant 0 : index
    %c0_9 = arith.constant 0 : index
    %8 = vector.load %arg7[%c0_8, %c0_9] : memref<1x32xf32, #tpu.memory_space<vmem>>, vector<1x32xf32>
    %9 = vector.broadcast %8 : vector<1x32xf32> to vector<256x32xf32>
    %10 = arith.addf %7, %9 : vector<256x32xf32>
    %cst_10 = arith.constant 0.000000e+00 : f32
    %11 = vector.broadcast %cst_10 : f32 to vector<256x32xf32>
    %12 = arith.maximumf %10, %11 : vector<256x32xf32>
    %13 = arith.truncf %12 : vector<256x32xf32> to vector<256x32xbf16>
    %c0_11 = arith.constant 0 : index
    %c0_12 = arith.constant 0 : index
    %14 = vector.load %arg8[%c0_11, %c0_12] : memref<32x16xbf16, #tpu.memory_space<vmem>>, vector<32x16xbf16>
    %cst_13 = arith.constant dense<0.000000e+00> : vector<256x16xf32>
    %15 = tpu.matmul %13, %14, %cst_13 {dimension_numbers = #tpu.dot_dimension_numbers<[1], [0], [0], [1], [0, 0, 1, 1], [], []>} : vector<256x32xbf16>, vector<32x16xbf16>, vector<256x16xf32> -> vector<256x16xf32>
    %c0_14 = arith.constant 0 : index
    %c0_15 = arith.constant 0 : index
    %16 = vector.load %arg9[%c0_14, %c0_15] : memref<1x16xf32, #tpu.memory_space<vmem>>, vector<1x16xf32>
    %17 = vector.broadcast %16 : vector<1x16xf32> to vector<256x16xf32>
    %18 = arith.addf %15, %17 : vector<256x16xf32>
    %cst_16 = arith.constant 0.000000e+00 : f32
    %19 = vector.broadcast %cst_16 : f32 to vector<256x16xf32>
    %20 = arith.maximumf %18, %19 : vector<256x16xf32>
    %21 = arith.truncf %1 : vector<256x40xf32> to vector<256x40xbf16>
    %c0_17 = arith.constant 0 : index
    %c0_18 = arith.constant 0 : index
    %c0_19 = arith.constant 0 : index
    %22 = vector.load %arg3[%c0_17, %c0_18, %c0_19] : memref<3x40x40xbf16, #tpu.memory_space<vmem>>, vector<1x40x40xbf16>
    %23 = vector.shape_cast %22 : vector<1x40x40xbf16> to vector<40x40xbf16>
    %cst_20 = arith.constant dense<0.000000e+00> : vector<256x40xf32>
    %24 = tpu.matmul %21, %23, %cst_20 {dimension_numbers = #tpu.dot_dimension_numbers<[1], [0], [0], [1], [0, 0, 1, 1], [], []>} : vector<256x40xbf16>, vector<40x40xbf16>, vector<256x40xf32> -> vector<256x40xf32>
    %c0_21 = arith.constant 0 : index
    %c0_22 = arith.constant 0 : index
    %c0_23 = arith.constant 0 : index
    %25 = vector.load %arg4[%c0_21, %c0_22, %c0_23] : memref<3x1x40xf32, #tpu.memory_space<vmem>>, vector<1x1x40xf32>
    %26 = vector.shape_cast %25 : vector<1x1x40xf32> to vector<1x40xf32>
    %27 = vector.broadcast %26 : vector<1x40xf32> to vector<256x40xf32>
    %28 = arith.addf %24, %27 : vector<256x40xf32>
    %29 = arith.mulf %1, %28 : vector<256x40xf32>
    %30 = arith.addf %29, %1 : vector<256x40xf32>
    %31 = arith.truncf %30 : vector<256x40xf32> to vector<256x40xbf16>
    %c1 = arith.constant 1 : index
    %c0_24 = arith.constant 0 : index
    %c0_25 = arith.constant 0 : index
    %32 = vector.load %arg3[%c1, %c0_24, %c0_25] : memref<3x40x40xbf16, #tpu.memory_space<vmem>>, vector<1x40x40xbf16>
    %33 = vector.shape_cast %32 : vector<1x40x40xbf16> to vector<40x40xbf16>
    %cst_26 = arith.constant dense<0.000000e+00> : vector<256x40xf32>
    %34 = tpu.matmul %31, %33, %cst_26 {dimension_numbers = #tpu.dot_dimension_numbers<[1], [0], [0], [1], [0, 0, 1, 1], [], []>} : vector<256x40xbf16>, vector<40x40xbf16>, vector<256x40xf32> -> vector<256x40xf32>
    %c1_27 = arith.constant 1 : index
    %c0_28 = arith.constant 0 : index
    %c0_29 = arith.constant 0 : index
    %35 = vector.load %arg4[%c1_27, %c0_28, %c0_29] : memref<3x1x40xf32, #tpu.memory_space<vmem>>, vector<1x1x40xf32>
    %36 = vector.shape_cast %35 : vector<1x1x40xf32> to vector<1x40xf32>
    %37 = vector.broadcast %36 : vector<1x40xf32> to vector<256x40xf32>
    %38 = arith.addf %34, %37 : vector<256x40xf32>
    %39 = arith.mulf %1, %38 : vector<256x40xf32>
    %40 = arith.addf %39, %30 : vector<256x40xf32>
    %41 = arith.truncf %40 : vector<256x40xf32> to vector<256x40xbf16>
    %c2 = arith.constant 2 : index
    %c0_30 = arith.constant 0 : index
    %c0_31 = arith.constant 0 : index
    %42 = vector.load %arg3[%c2, %c0_30, %c0_31] : memref<3x40x40xbf16, #tpu.memory_space<vmem>>, vector<1x40x40xbf16>
    %43 = vector.shape_cast %42 : vector<1x40x40xbf16> to vector<40x40xbf16>
    %cst_32 = arith.constant dense<0.000000e+00> : vector<256x40xf32>
    %44 = tpu.matmul %41, %43, %cst_32 {dimension_numbers = #tpu.dot_dimension_numbers<[1], [0], [0], [1], [0, 0, 1, 1], [], []>} : vector<256x40xbf16>, vector<40x40xbf16>, vector<256x40xf32> -> vector<256x40xf32>
    %c2_33 = arith.constant 2 : index
    %c0_34 = arith.constant 0 : index
    %c0_35 = arith.constant 0 : index
    %45 = vector.load %arg4[%c2_33, %c0_34, %c0_35] : memref<3x1x40xf32, #tpu.memory_space<vmem>>, vector<1x1x40xf32>
    %46 = vector.shape_cast %45 : vector<1x1x40xf32> to vector<1x40xf32>
    %47 = vector.broadcast %46 : vector<1x40xf32> to vector<256x40xf32>
    %48 = arith.addf %44, %47 : vector<256x40xf32>
    %49 = arith.mulf %1, %48 : vector<256x40xf32>
    %50 = arith.addf %49, %40 : vector<256x40xf32>
    %c0_36 = arith.constant 0 : index
    %c0_37 = arith.constant 0 : index
    %51 = vector.load %arg10[%c0_36, %c0_37] : memref<1x40xf32, #tpu.memory_space<vmem>>, vector<1x40xf32>
    %52 = vector.broadcast %51 : vector<1x40xf32> to vector<256x40xf32>
    %53 = arith.mulf %50, %52 : vector<256x40xf32>
    %cst_38 = arith.constant dense<0.000000e+00> : vector<256xf32>
    %54 = vector.multi_reduction <add>, %53, %cst_38 [1] : vector<256x40xf32> to vector<256xf32>
    %55 = vector.shape_cast %54 : vector<256xf32> to vector<256x1xf32>
    %c0_39 = arith.constant 0 : index
    %c0_40 = arith.constant 0 : index
    %56 = vector.load %arg11[%c0_39, %c0_40] : memref<1x16xf32, #tpu.memory_space<vmem>>, vector<1x16xf32>
    %57 = vector.broadcast %56 : vector<1x16xf32> to vector<256x16xf32>
    %58 = arith.mulf %20, %57 : vector<256x16xf32>
    %cst_41 = arith.constant dense<0.000000e+00> : vector<256xf32>
    %59 = vector.multi_reduction <add>, %58, %cst_41 [1] : vector<256x16xf32> to vector<256xf32>
    %60 = vector.shape_cast %59 : vector<256xf32> to vector<256x1xf32>
    %61 = arith.addf %55, %60 : vector<256x1xf32>
    %c0_42 = arith.constant 0 : index
    %c0_43 = arith.constant 0 : index
    %62 = vector.load %arg12[%c0_42, %c0_43] : memref<1x1xf32, #tpu.memory_space<vmem>>, vector<1x1xf32>
    %63 = vector.broadcast %62 : vector<1x1xf32> to vector<256x1xf32>
    %64 = arith.addf %61, %63 : vector<256x1xf32>
    %65 = arith.negf %64 : vector<256x1xf32>
    %66 = math.exp %65 : vector<256x1xf32>
    %cst_44 = arith.constant 1.000000e+00 : f32
    %67 = vector.broadcast %cst_44 : f32 to vector<256x1xf32>
    %68 = arith.addf %67, %66 : vector<256x1xf32>
    %69 = arith.divf %67, %68 : vector<256x1xf32>
    %c0_45 = arith.constant 0 : index
    %c0_46 = arith.constant 0 : index
    %70 = vector.load %arg13[%c0_45, %c0_46] : memref<256x1xf32, #tpu.memory_space<vmem>>, vector<256x1xf32>
    tpu.vector_store %arg13[%c0_45, %c0_46], %69 {strides = array<i32>} : memref<256x1xf32, #tpu.memory_space<vmem>>, vector<256x1xf32>,
    return
  }
  func.func @transform_0(%arg0: i32) -> (i32, i32) {
    %c0_i32 = arith.constant 0 : i32
    %c0_i32_0 = arith.constant 0 : i32
    return %arg0, %c0_i32 : i32, i32
  }
  func.func @transform_1(%arg0: i32) -> (i32, i32) {
    %c0_i32 = arith.constant 0 : i32
    %c0_i32_0 = arith.constant 0 : i32
    return %arg0, %c0_i32 : i32, i32
  }
  func.func @transform_2(%arg0: i32) -> (i32, i32, i32) {
    %c0_i32 = arith.constant 0 : i32
    %c0_i32_0 = arith.constant 0 : i32
    %c0_i32_1 = arith.constant 0 : i32
    %c0_i32_2 = arith.constant 0 : i32
    return %c0_i32, %c0_i32_0, %c0_i32_1 : i32, i32, i32
  }
  func.func @transform_3(%arg0: i32) -> (i32, i32, i32) {
    %c0_i32 = arith.constant 0 : i32
    %c0_i32_0 = arith.constant 0 : i32
    %c0_i32_1 = arith.constant 0 : i32
    %c0_i32_2 = arith.constant 0 : i32
    return %c0_i32, %c0_i32_0, %c0_i32_1 : i32, i32, i32
  }
  func.func @transform_4(%arg0: i32) -> (i32, i32) {
    %c0_i32 = arith.constant 0 : i32
    %c0_i32_0 = arith.constant 0 : i32
    %c0_i32_1 = arith.constant 0 : i32
    return %c0_i32, %c0_i32_0 : i32, i32
  }
  func.func @transform_5(%arg0: i32) -> (i32, i32) {
    %c0_i32 = arith.constant 0 : i32
    %c0_i32_0 = arith.constant 0 : i32
    %c0_i32_1 = arith.constant 0 : i32
    return %c0_i32, %c0_i32_0 : i32, i32
  }
  func.func @transform_6(%arg0: i32) -> (i32, i32) {
    %c0_i32 = arith.constant 0 : i32
    %c0_i32_0 = arith.constant 0 : i32
    %c0_i32_1 = arith.constant 0 : i32
    return %c0_i32, %c0_i32_0 : i32, i32
  }
  func.func @transform_7(%arg0: i32) -> (i32, i32) {
    %c0_i32 = arith.constant 0 : i32
    %c0_i32_0 = arith.constant 0 : i32
    %c0_i32_1 = arith.constant 0 : i32
    return %c0_i32, %c0_i32_0 : i32, i32
  }
  func.func @transform_8(%arg0: i32) -> (i32, i32) {
    %c0_i32 = arith.constant 0 : i32
    %c0_i32_0 = arith.constant 0 : i32
    %c0_i32_1 = arith.constant 0 : i32
    return %c0_i32, %c0_i32_0 : i32, i32
  }
  func.func @transform_9(%arg0: i32) -> (i32, i32) {
    %c0_i32 = arith.constant 0 : i32
    %c0_i32_0 = arith.constant 0 : i32
    %c0_i32_1 = arith.constant 0 : i32
    return %c0_i32, %c0_i32_0 : i32, i32
  }
  func.func @transform_10(%arg0: i32) -> (i32, i32) {
    %c0_i32 = arith.constant 0 : i32
    %c0_i32_0 = arith.constant 0 : i32
    %c0_i32_1 = arith.constant 0 : i32
    return %c0_i32, %c0_i32_0 : i32, i32
  }
  func.func @transform_11(%arg0: i32) -> (i32, i32) {
    %c0_i32 = arith.constant 0 : i32
    %c0_i32_0 = arith.constant 0 : i32
    %c0_i32_1 = arith.constant 0 : i32
    return %c0_i32, %c0_i32_0 : i32, i32
  }
  func.func @transform_12(%arg0: i32) -> (i32, i32) {
    %c0_i32 = arith.constant 0 : i32
    %c0_i32_0 = arith.constant 0 : i32
    return %arg0, %c0_i32 : i32, i32
  }
}

</mosaic_0001>

<llo_original>
// kernel: tpu_custom_call.1
$region0: #{tpu_custom_call.1}
  #allocation0 [shape = 'u32[]', space=smem, size = 0x4, offset = 0x4, fixed_abs, tag = 'smem constant byte address 0x4 - core index']
  #allocation1 [shape = 'u32[144,128]{1,0:T(1,128)}', space=vmem, size = 0x12000, scoped, tag = 'internal scratch']
  #allocation2 [shape = 'f32[1,1]{1,0:T(1,128)S(1)}', space=vmem, size = 0x200, scoped, tag = 'scoped memory for tpu_custom_call.1']
  %s0 = inlined_call_operand.vmem [shape: bf16[512,40], index: 0, kind: input, shape index: {}]
  %s1 = inlined_call_operand.vmem [shape: bf16[512,16], index: 1, kind: input, shape index: {}]
  %s2 = inlined_call_operand.vmem [shape: bf16[3,40,40], index: 2, kind: input, shape index: {}]
  %s3 = inlined_call_operand.vmem [shape: f32[3,1,40], index: 3, kind: input, shape index: {}]
  %s4 = inlined_call_operand.vmem [shape: bf16[40,32], index: 4, kind: input, shape index: {}]
  %s5 = inlined_call_operand.vmem [shape: bf16[16,32], index: 5, kind: input, shape index: {}]
  %s6 = inlined_call_operand.vmem [shape: f32[1,32], index: 6, kind: input, shape index: {}]
  %s7 = inlined_call_operand.vmem [shape: bf16[32,16], index: 7, kind: input, shape index: {}]
  %s8 = inlined_call_operand.vmem [shape: f32[1,16], index: 8, kind: input, shape index: {}]
  %s9 = inlined_call_operand.vmem [shape: f32[1,40], index: 9, kind: input, shape index: {}]
  %s10 = inlined_call_operand.vmem [shape: f32[1,16], index: 10, kind: input, shape index: {}]
  %s11 = inlined_call_operand.<no memory space> [shape: f32[1,1], index: 11, kind: input, shape index: {}]
  %s12 = inlined_call_operand.vmem [shape: f32[512,1], index: 12, kind: output, shape index: {}]
  %s13 = sld [smem:[#allocation0]]
  $region81: #{tpu_custom_call.1} parent=0
    _
  %s15 = ssub.s32 1, %s13
  %s16 = scalar_select 0, %s15, %s13
  %v17 = vstv %s11
  %18 = vst [vmem:[#allocation2] sm:$0x1] %v17
  loop: start=0, step=1, limit=4
  $region2: #{tpu_custom_call.1} parent=0 // loop_pre_header
    _
  $region3: #{tpu_custom_call.1} parent=0 // loop_header
    %s20 = sphi 0, %s24
    %p21 = scmp.ge.s32.totalorder %s20, 4
    %s30 = sphi 0, %s32
    %s33 = sphi 0, %s30
    %s34 = sphi 0, %s33
    %s50 = sphi 0, %s34
    %s56 = sphi 0, %s58
    %s59 = sphi 0, %s56
    %s60 = sphi 0, %s59
    %s76 = sphi 0, %s60
    %s80 = sphi 0, %s80
    %s82 = sphi 0, %s80
    %s83 = sphi 0, %s82
    %s97 = sphi 0, %s83
    %s101 = sphi 0, %s101
    %s103 = sphi 0, %s101
    %s104 = sphi 0, %s103
    %s118 = sphi 0, %s104
    %s122 = sphi 0, %s122
    %s124 = sphi 0, %s122
    %s125 = sphi 0, %s124
    %s139 = sphi 0, %s125
    %s143 = sphi 0, %s143
    %s145 = sphi 0, %s143
    %s146 = sphi 0, %s145
    %s160 = sphi 0, %s146
    %s164 = sphi 0, %s164
    %s166 = sphi 0, %s164
    %s167 = sphi 0, %s166
    %s181 = sphi 0, %s167
    %s185 = sphi 0, %s185
    %s187 = sphi 0, %s185
    %s188 = sphi 0, %s187
    %s202 = sphi 0, %s188
    %s206 = sphi 0, %s206
    %s208 = sphi 0, %s206
    %s209 = sphi 0, %s208
    %s223 = sphi 0, %s209
    %s227 = sphi 0, %s227
    %s229 = sphi 0, %s227
    %s230 = sphi 0, %s229
    %s244 = sphi 0, %s230
    %s248 = sphi 0, %s248
    %s250 = sphi 0, %s248
    %s251 = sphi 0, %s250
    %s265 = sphi 0, %s251
    %s269 = sphi 0, %s269
    %s271 = sphi 0, %s269
    %s272 = sphi 0, %s271
    %s286 = sphi 0, %s272
    %s292 = sphi 0, %s294
    %s295 = sphi 0, %s292
    %s296 = sphi 0, %s295
    %s312 = sphi 0, %s296
  $region4: #{tpu_custom_call.1} parent=0 // loop_header_branch
    %23 = sbr.rel (%p21) target = $region8
  $region5: #{tpu_custom_call.1} parent=0 // loop_body
    %s25 = ssub.s32 %s20, 1
    %s26 = ssub.s32 %s20, 2
    %s27 = sadd.s32 %s20, 1
    %s28 = ssub.s32 %s20, %s27
    %p29 = scmp.eq.s32.totalorder %s28, 0
    %s31 = sadd.s32 %s30, 1
    %s32 = scalar_select %p29, %s30, %s31
    %p35 = pneg %p29
    %p36 = scmp.eq.s32.totalorder %s20, 1
    %p37 = por %p35, %p36
    %p38 = scmp.ne.s32.totalorder %s30, %s33
    %p39 = scmp.eq.s32.totalorder %s20, 0
    %p40 = por %p38, %p39
    %p41 = scmp.ne.s32.totalorder %s30, %s33
    %p42 = scmp.eq.s32.totalorder %s25, 1
    %p43 = por %p41, %p42
    %p44 = scmp.ne.s32.totalorder %s33, %s34
    %p45 = scmp.eq.s32.totalorder %s25, 0
    %p46 = por %p44, %p45
    %p47 = scmp.ne.s32.totalorder %s33, %s34
    %p48 = scmp.eq.s32.totalorder %s26, 1
    %p49 = por %p47, %p48
    %p51 = scmp.ne.s32.totalorder %s34, %s50
    %p52 = scmp.eq.s32.totalorder %s26, 0
    %p53 = por %p51, %p52
    %s54 = ssub.s32 %s20, %s27
    %p55 = scmp.eq.s32.totalorder %s54, 0
    %s57 = sadd.s32 %s56, 1
    %s58 = scalar_select %p55, %s56, %s57
    %p61 = pneg %p55
    %p62 = scmp.eq.s32.totalorder %s20, 1
    %p63 = por %p61, %p62
    %p64 = scmp.ne.s32.totalorder %s56, %s59
    %p65 = scmp.eq.s32.totalorder %s20, 0
    %p66 = por %p64, %p65
    %p67 = scmp.ne.s32.totalorder %s56, %s59
    %p68 = scmp.eq.s32.totalorder %s25, 1
    %p69 = por %p67, %p68
    %p70 = scmp.ne.s32.totalorder %s59, %s60
    %p71 = scmp.eq.s32.totalorder %s25, 0
    %p72 = por %p70, %p71
    %p73 = scmp.ne.s32.totalorder %s59, %s60
    %p74 = scmp.eq.s32.totalorder %s26, 1
    %p75 = por %p73, %p74
    %p77 = scmp.ne.s32.totalorder %s60, %s76
    %p78 = scmp.eq.s32.totalorder %s26, 0
    %p79 = por %p77, %p78
    %s81 = sadd.s32 %s80, 1
    %p84 = scmp.eq.s32.totalorder %s20, 1
    %p85 = scmp.ne.s32.totalorder %s80, %s82
    %p86 = scmp.eq.s32.totalorder %s20, 0
    %p87 = por %p85, %p86
    %p88 = scmp.ne.s32.totalorder %s80, %s82
    %p89 = scmp.eq.s32.totalorder %s25, 1
    %p90 = por %p88, %p89
    %p91 = scmp.ne.s32.totalorder %s82, %s83
    %p92 = scmp.eq.s32.totalorder %s25, 0
    %p93 = por %p91, %p92
    %p94 = scmp.ne.s32.totalorder %s82, %s83
    %p95 = scmp.eq.s32.totalorder %s26, 1
    %p96 = por %p94, %p95
    %p98 = scmp.ne.s32.totalorder %s83, %s97
    %p99 = scmp.eq.s32.totalorder %s26, 0
    %p100 = por %p98, %p99
    %s102 = sadd.s32 %s101, 1
    %p105 = scmp.eq.s32.totalorder %s20, 1
    %p106 = scmp.ne.s32.totalorder %s101, %s103
    %p107 = scmp.eq.s32.totalorder %s20, 0
    %p108 = por %p106, %p107
    %p109 = scmp.ne.s32.totalorder %s101, %s103
    %p110 = scmp.eq.s32.totalorder %s25, 1
    %p111 = por %p109, %p110
    %p112 = scmp.ne.s32.totalorder %s103, %s104
    %p113 = scmp.eq.s32.totalorder %s25, 0
    %p114 = por %p112, %p113
    %p115 = scmp.ne.s32.totalorder %s103, %s104
    %p116 = scmp.eq.s32.totalorder %s26, 1
    %p117 = por %p115, %p116
    %p119 = scmp.ne.s32.totalorder %s104, %s118
    %p120 = scmp.eq.s32.totalorder %s26, 0
    %p121 = por %p119, %p120
    %s123 = sadd.s32 %s122, 1
    %p126 = scmp.eq.s32.totalorder %s20, 1
    %p127 = scmp.ne.s32.totalorder %s122, %s124
    %p128 = scmp.eq.s32.totalorder %s20, 0
    %p129 = por %p127, %p128
    %p130 = scmp.ne.s32.totalorder %s122, %s124
    %p131 = scmp.eq.s32.totalorder %s25, 1
    %p132 = por %p130, %p131
    %p133 = scmp.ne.s32.totalorder %s124, %s125
    %p134 = scmp.eq.s32.totalorder %s25, 0
    %p135 = por %p133, %p134
    %p136 = scmp.ne.s32.totalorder %s124, %s125
    %p137 = scmp.eq.s32.totalorder %s26, 1
    %p138 = por %p136, %p137
    %p140 = scmp.ne.s32.totalorder %s125, %s139
    %p141 = scmp.eq.s32.totalorder %s26, 0
    %p142 = por %p140, %p141
    %s144 = sadd.s32 %s143, 1
    %p147 = scmp.eq.s32.totalorder %s20, 1
    %p148 = scmp.ne.s32.totalorder %s143, %s145
    %p149 = scmp.eq.s32.totalorder %s20, 0
    %p150 = por %p148, %p149
    %p151 = scmp.ne.s32.totalorder %s143, %s145
    %p152 = scmp.eq.s32.totalorder %s25, 1
    %p153 = por %p151, %p152
    %p154 = scmp.ne.s32.totalorder %s145, %s146
    %p155 = scmp.eq.s32.totalorder %s25, 0
    %p156 = por %p154, %p155
    %p157 = scmp.ne.s32.totalorder %s145, %s146
    %p158 = scmp.eq.s32.totalorder %s26, 1
    %p159 = por %p157, %p158
    %p161 = scmp.ne.s32.totalorder %s146, %s160
    %p162 = scmp.eq.s32.totalorder %s26, 0
    %p163 = por %p161, %p162
    %s165 = sadd.s32 %s164, 1
    %p168 = scmp.eq.s32.totalorder %s20, 1
    %p169 = scmp.ne.s32.totalorder %s164, %s166
    %p170 = scmp.eq.s32.totalorder %s20, 0
    %p171 = por %p169, %p170
    %p172 = scmp.ne.s32.totalorder %s164, %s166
    %p173 = scmp.eq.s32.totalorder %s25, 1
    %p174 = por %p172, %p173
    %p175 = scmp.ne.s32.totalorder %s166, %s167
    %p176 = scmp.eq.s32.totalorder %s25, 0
    %p177 = por %p175, %p176
    %p178 = scmp.ne.s32.totalorder %s166, %s167
    %p179 = scmp.eq.s32.totalorder %s26, 1
    %p180 = por %p178, %p179
    %p182 = scmp.ne.s32.totalorder %s167, %s181
    %p183 = scmp.eq.s32.totalorder %s26, 0
    %p184 = por %p182, %p183
    %s186 = sadd.s32 %s185, 1
    %p189 = scmp.eq.s32.totalorder %s20, 1
    %p190 = scmp.ne.s32.totalorder %s185, %s187
    %p191 = scmp.eq.s32.totalorder %s20, 0
    %p192 = por %p190, %p191
    %p193 = scmp.ne.s32.totalorder %s185, %s187
    %p194 = scmp.eq.s32.totalorder %s25, 1
    %p195 = por %p193, %p194
    %p196 = scmp.ne.s32.totalorder %s187, %s188
    %p197 = scmp.eq.s32.totalorder %s25, 0
    %p198 = por %p196, %p197
    %p199 = scmp.ne.s32.totalorder %s187, %s188
    %p200 = scmp.eq.s32.totalorder %s26, 1
    %p201 = por %p199, %p200
    %p203 = scmp.ne.s32.totalorder %s188, %s202
    %p204 = scmp.eq.s32.totalorder %s26, 0
    %p205 = por %p203, %p204
    %s207 = sadd.s32 %s206, 1
    %p210 = scmp.eq.s32.totalorder %s20, 1
    %p211 = scmp.ne.s32.totalorder %s206, %s208
    %p212 = scmp.eq.s32.totalorder %s20, 0
    %p213 = por %p211, %p212
    %p214 = scmp.ne.s32.totalorder %s206, %s208
    %p215 = scmp.eq.s32.totalorder %s25, 1
    %p216 = por %p214, %p215
    %p217 = scmp.ne.s32.totalorder %s208, %s209
    %p218 = scmp.eq.s32.totalorder %s25, 0
    %p219 = por %p217, %p218
    %p220 = scmp.ne.s32.totalorder %s208, %s209
    %p221 = scmp.eq.s32.totalorder %s26, 1
    %p222 = por %p220, %p221
    %p224 = scmp.ne.s32.totalorder %s209, %s223
    %p225 = scmp.eq.s32.totalorder %s26, 0
    %p226 = por %p224, %p225
    %s228 = sadd.s32 %s227, 1
    %p231 = scmp.eq.s32.totalorder %s20, 1
    %p232 = scmp.ne.s32.totalorder %s227, %s229
    %p233 = scmp.eq.s32.totalorder %s20, 0
    %p234 = por %p232, %p233
    %p235 = scmp.ne.s32.totalorder %s227, %s229
    %p236 = scmp.eq.s32.totalorder %s25, 1
    %p237 = por %p235, %p236
    %p238 = scmp.ne.s32.totalorder %s229, %s230
    %p239 = scmp.eq.s32.totalorder %s25, 0
    %p240 = por %p238, %p239
    %p241 = scmp.ne.s32.totalorder %s229, %s230
    %p242 = scmp.eq.s32.totalorder %s26, 1
    %p243 = por %p241, %p242
    %p245 = scmp.ne.s32.totalorder %s230, %s244
    %p246 = scmp.eq.s32.totalorder %s26, 0
    %p247 = por %p245, %p246
    %s249 = sadd.s32 %s248, 1
    %p252 = scmp.eq.s32.totalorder %s20, 1
    %p253 = scmp.ne.s32.totalorder %s248, %s250
    %p254 = scmp.eq.s32.totalorder %s20, 0
    %p255 = por %p253, %p254
    %p256 = scmp.ne.s32.totalorder %s248, %s250
    %p257 = scmp.eq.s32.totalorder %s25, 1
    %p258 = por %p256, %p257
    %p259 = scmp.ne.s32.totalorder %s250, %s251
    %p260 = scmp.eq.s32.totalorder %s25, 0
    %p261 = por %p259, %p260
    %p262 = scmp.ne.s32.totalorder %s250, %s251
    %p263 = scmp.eq.s32.totalorder %s26, 1
    %p264 = por %p262, %p263
    %p266 = scmp.ne.s32.totalorder %s251, %s265
    %p267 = scmp.eq.s32.totalorder %s26, 0
    %p268 = por %p266, %p267
    %s270 = sadd.s32 %s269, 1
    %p273 = scmp.eq.s32.totalorder %s20, 1
    %p274 = scmp.ne.s32.totalorder %s269, %s271
    %p275 = scmp.eq.s32.totalorder %s20, 0
    %p276 = por %p274, %p275
    %p277 = scmp.ne.s32.totalorder %s269, %s271
    %p278 = scmp.eq.s32.totalorder %s25, 1
    %p279 = por %p277, %p278
    %p280 = scmp.ne.s32.totalorder %s271, %s272
    %p281 = scmp.eq.s32.totalorder %s25, 0
    %p282 = por %p280, %p281
    %p283 = scmp.ne.s32.totalorder %s271, %s272
    %p284 = scmp.eq.s32.totalorder %s26, 1
    %p285 = por %p283, %p284
    %p287 = scmp.ne.s32.totalorder %s272, %s286
    %p288 = scmp.eq.s32.totalorder %s26, 0
    %p289 = por %p287, %p288
    %s290 = ssub.s32 %s20, %s27
    %p291 = scmp.eq.s32.totalorder %s290, 0
    %s293 = sadd.s32 %s292, 1
    %s294 = scalar_select %p291, %s292, %s293
    %p297 = pneg %p291
    %p298 = scmp.eq.s32.totalorder %s20, 1
    %p299 = por %p297, %p298
    %p300 = scmp.ne.s32.totalorder %s292, %s295
    %p301 = scmp.eq.s32.totalorder %s20, 0
    %p302 = por %p300, %p301
    %p303 = scmp.ne.s32.totalorder %s292, %s295
    %p304 = scmp.eq.s32.totalorder %s25, 1
    %p305 = por %p303, %p304
    %p306 = scmp.ne.s32.totalorder %s295, %s296
    %p307 = scmp.eq.s32.totalorder %s25, 0
    %p308 = por %p306, %p307
    %p309 = scmp.ne.s32.totalorder %s295, %s296
    %p310 = scmp.eq.s32.totalorder %s26, 1
    %p311 = por %p309, %p310
    %p313 = scmp.ne.s32.totalorder %s296, %s312
    %p314 = scmp.eq.s32.totalorder %s26, 0
    %p315 = por %p313, %p314
    %p316 = scmp.le.s32.totalorder 1, %s20
    %p317 = scmp.lt.s32.totalorder %s20, 3
    %p318 = pnand %p316, %p317
    %p319 = pneg %p318
    // Predicated region
    $region9: #{tpu_custom_call.1} parent=5 // pred_check
      _
    $region10: #{tpu_custom_call.1} parent=5 // pred_check_branch
      %321 = sbr.rel (%p318) target = $region12
    $region11: #{tpu_custom_call.1} parent=5 // pred_region
      %s322 = ssub.s32 %s20, 1
      // Predicated region
      $region13: #{tpu_custom_call.1} parent=11 // pred_check
        %p323 = pneg %p93
      $region14: #{tpu_custom_call.1} parent=11 // pred_check_branch
        %325 = sbr.rel (%p323) target = $region16
      $region15: #{tpu_custom_call.1} parent=11 // pred_region
        _
      $region16: #{tpu_custom_call.1} parent=11 // pred_fallthru
        _
      // Predicated region
      $region17: #{tpu_custom_call.1} parent=11 // pred_check
        %p326 = pneg %p114
      $region18: #{tpu_custom_call.1} parent=11 // pred_check_branch
        %328 = sbr.rel (%p326) target = $region20
      $region19: #{tpu_custom_call.1} parent=11 // pred_region
        _
      $region20: #{tpu_custom_call.1} parent=11 // pred_fallthru
        _
      // Predicated region
      $region21: #{tpu_custom_call.1} parent=11 // pred_check
        %p329 = pneg %p135
      $region22: #{tpu_custom_call.1} parent=11 // pred_check_branch
        %331 = sbr.rel (%p329) target = $region24
      $region23: #{tpu_custom_call.1} parent=11 // pred_region
        _
      $region24: #{tpu_custom_call.1} parent=11 // pred_fallthru
        _
      // Predicated region
      $region25: #{tpu_custom_call.1} parent=11 // pred_check
        %p332 = pneg %p156
      $region26: #{tpu_custom_call.1} parent=11 // pred_check_branch
        %334 = sbr.rel (%p332) target = $region28
      $region27: #{tpu_custom_call.1} parent=11 // pred_region
        _
      $region28: #{tpu_custom_call.1} parent=11 // pred_fallthru
        _
      // Predicated region
      $region29: #{tpu_custom_call.1} parent=11 // pred_check
        %p335 = pneg %p177
      $region30: #{tpu_custom_call.1} parent=11 // pred_check_branch
        %337 = sbr.rel (%p335) target = $region32
      $region31: #{tpu_custom_call.1} parent=11 // pred_region
        _
      $region32: #{tpu_custom_call.1} parent=11 // pred_fallthru
        _
      // Predicated region
      $region33: #{tpu_custom_call.1} parent=11 // pred_check
        %p338 = pneg %p198
      $region34: #{tpu_custom_call.1} parent=11 // pred_check_branch
        %340 = sbr.rel (%p338) target = $region36
      $region35: #{tpu_custom_call.1} parent=11 // pred_region
        _
      $region36: #{tpu_custom_call.1} parent=11 // pred_fallthru
        _
      // Predicated region
      $region37: #{tpu_custom_call.1} parent=11 // pred_check
        %p341 = pneg %p219
      $region38: #{tpu_custom_call.1} parent=11 // pred_check_branch
        %343 = sbr.rel (%p341) target = $region40
      $region39: #{tpu_custom_call.1} parent=11 // pred_region
        _
      $region40: #{tpu_custom_call.1} parent=11 // pred_fallthru
        _
      // Predicated region
      $region41: #{tpu_custom_call.1} parent=11 // pred_check
        %p344 = pneg %p240
      $region42: #{tpu_custom_call.1} parent=11 // pred_check_branch
        %346 = sbr.rel (%p344) target = $region44
      $region43: #{tpu_custom_call.1} parent=11 // pred_region
        _
      $region44: #{tpu_custom_call.1} parent=11 // pred_fallthru
        _
      // Predicated region
      $region45: #{tpu_custom_call.1} parent=11 // pred_check
        %p347 = pneg %p261
      $region46: #{tpu_custom_call.1} parent=11 // pred_check_branch
        %349 = sbr.rel (%p347) target = $region48
      $region47: #{tpu_custom_call.1} parent=11 // pred_region
        _
      $region48: #{tpu_custom_call.1} parent=11 // pred_fallthru
        _
      // Predicated region
      $region49: #{tpu_custom_call.1} parent=11 // pred_check
        %p350 = pneg %p282
      $region50: #{tpu_custom_call.1} parent=11 // pred_check_branch
        %352 = sbr.rel (%p350) target = $region52
      $region51: #{tpu_custom_call.1} parent=11 // pred_region
        _
      $region52: #{tpu_custom_call.1} parent=11 // pred_fallthru
        _
    $region12: #{tpu_custom_call.1} parent=5 // pred_fallthru
      _
    %p353 = scmp.lt.s32.totalorder %s20, 2
    // Predicated region
    $region53: #{tpu_custom_call.1} parent=5 // pred_check
      %p354 = pneg %p353
    $region54: #{tpu_custom_call.1} parent=5 // pred_check_branch
      %356 = sbr.rel (%p354) target = $region56
    $region55: #{tpu_custom_call.1} parent=5 // pred_region
      // Predicated region
      $region57: #{tpu_custom_call.1} parent=55 // pred_check
        %p357 = pneg %p40
      $region58: #{tpu_custom_call.1} parent=55 // pred_check_branch
        %359 = sbr.rel (%p357) target = $region60
      $region59: #{tpu_custom_call.1} parent=55 // pred_region
        %s360 = smul.u32 32, %s20
        %p361 = scmp.lt.s32.totalorder %s360, 63
        %s362 = scalar_select %p361, %s360, 63
        %s363 = smul.addr %s362, 4
        %s364 = scalar_lea.vmem %s0, %s363
        %s365 = smul.u32 32, %s20
      $region60: #{tpu_custom_call.1} parent=55 // pred_fallthru
        _
      // Predicated region
      $region61: #{tpu_custom_call.1} parent=55 // pred_check
        %p366 = pneg %p66
      $region62: #{tpu_custom_call.1} parent=55 // pred_check_branch
        %368 = sbr.rel (%p366) target = $region64
      $region63: #{tpu_custom_call.1} parent=55 // pred_region
        %s369 = smul.u32 32, %s20
        %p370 = scmp.lt.s32.totalorder %s369, 63
        %s371 = scalar_select %p370, %s369, 63
        %s372 = smul.addr %s371, 4
        %s373 = scalar_lea.vmem %s1, %s372
        %s374 = smul.u32 32, %s20
      $region64: #{tpu_custom_call.1} parent=55 // pred_fallthru
        _
    $region56: #{tpu_custom_call.1} parent=5 // pred_fallthru
      _
    %p375 = scmp.le.s32.totalorder 1, %s20
    %p376 = scmp.lt.s32.totalorder %s20, 3
    %p377 = pnand %p375, %p376
    %p378 = pneg %p377
    // Predicated region
    $region65: #{tpu_custom_call.1} parent=5 // pred_check
      _
    $region66: #{tpu_custom_call.1} parent=5 // pred_check_branch
      %380 = sbr.rel (%p377) target = $region68
    $region67: #{tpu_custom_call.1} parent=5 // pred_region
      %s381 = ssub.s32 %s20, 1
      %s382 = smul.u32 32, %s25
      %p383 = scmp.lt.s32.totalorder %s382, 63
      %s384 = scalar_select %p383, %s382, 63
      %s385 = smul.addr %s384, 4
      %s386 = scalar_lea.vmem %s0, %s385
      %p387 = pneg %p46
      %p388 = pneg %p43
      %s389 = smul.u32 32, %s25
      %p390 = scmp.lt.s32.totalorder %s389, 63
      %s391 = scalar_select %p390, %s389, 63
      %s392 = smul.addr %s391, 4
      %s393 = scalar_lea.vmem %s1, %s392
      %p394 = pneg %p72
      %p395 = pneg %p69
      %p396 = pneg %p93
      %p397 = pneg %p90
      %p398 = pneg %p114
      %p399 = pneg %p111
      %p400 = pneg %p135
      %p401 = pneg %p132
      %p402 = pneg %p156
      %p403 = pneg %p153
      %p404 = pneg %p177
      %p405 = pneg %p174
      %p406 = pneg %p198
      %p407 = pneg %p195
      %p408 = pneg %p219
      %p409 = pneg %p216
      %p410 = pneg %p240
      %p411 = pneg %p237
      %p412 = pneg %p261
      %p413 = pneg %p258
      %p414 = pneg %p282
      %p415 = pneg %p279
      %p416 = pneg %p308
      %p417 = pneg %p305
      %s418 = smul.u32 32, %s25
      %p419 = scmp.lt.s32.totalorder %s418, 63
      %s420 = scalar_select %p419, %s418, 63
      %s421 = smul.addr %s420, 8
      %s422 = scalar_lea.vmem %s12, %s421
      %s423 = smul.u32 32, %s25
      %p424 = scmp.lt.s32.totalorder %s423, 63
      %s425 = scalar_select %p424, %s423, 63
      %s426 = smul.addr %s425, 4
      %s427 = scalar_lea.vmem %s0, %s426
      %s428 = smul.u32 32, %s25
      %s429 = smul.u32 32, %s25
      %p430 = scmp.lt.s32.totalorder %s429, 63
      %s431 = scalar_select %p430, %s429, 63
      %s432 = smul.addr %s431, 4
      %s433 = scalar_lea.vmem %s1, %s432
      %s434 = smul.u32 32, %s25
      %s435 = smul.u32 32, %s25
      %p436 = scmp.lt.s32.totalorder %s435, 63
      %s437 = scalar_select %p436, %s435, 63
      %s438 = smul.addr %s437, 8
      %s439 = scalar_lea.vmem %s12, %s438
      %s440 = smul.u32 32, %s25
      %v442 = vld [vmem:[%s427] sm:$0xf]
      %v443 = vld [vmem:[%s427 + $0x4] sm:$0xf]
      %v444 = vld [vmem:[%s427 + $0x8] sm:$0xf]
      %v445 = vld [vmem:[%s427 + $0xc] sm:$0xf]
      %v446 = vld [vmem:[%s427 + $0x10] sm:$0xf]
      %v447 = vld [vmem:[%s427 + $0x14] sm:$0xf]
      %v448 = vld [vmem:[%s427 + $0x18] sm:$0xf]
      %v449 = vld [vmem:[%s427 + $0x1c] sm:$0xf]
      %v450 = vld [vmem:[%s427 + $0x20] sm:$0xf]
      %v451 = vld [vmem:[%s427 + $0x24] sm:$0xf]
      %v452 = vld [vmem:[%s427 + $0x28] sm:$0xf]
      %v453 = vld [vmem:[%s427 + $0x2c] sm:$0xf]
      %v454 = vld [vmem:[%s427 + $0x30] sm:$0xf]
      %v455 = vld [vmem:[%s427 + $0x34] sm:$0xf]
      %v456 = vld [vmem:[%s427 + $0x38] sm:$0xf]
      %v457 = vld [vmem:[%s427 + $0x3c] sm:$0xf]
      %v458 = vld [vmem:[%s427 + $0x40] sm:$0xf]
      %v459 = vld [vmem:[%s427 + $0x44] sm:$0xf]
      %v460 = vld [vmem:[%s427 + $0x48] sm:$0xf]
      %v461 = vld [vmem:[%s427 + $0x4c] sm:$0xf]
      %v462 = vld [vmem:[%s427 + $0x50] sm:$0xf]
      %v463 = vld [vmem:[%s427 + $0x54] sm:$0xf]
      %v464 = vld [vmem:[%s427 + $0x58] sm:$0xf]
      %v465 = vld [vmem:[%s427 + $0x5c] sm:$0xf]
      %v466 = vld [vmem:[%s427 + $0x60] sm:$0xf]
      %v467 = vld [vmem:[%s427 + $0x64] sm:$0xf]
      %v468 = vld [vmem:[%s427 + $0x68] sm:$0xf]
      %v469 = vld [vmem:[%s427 + $0x6c] sm:$0xf]
      %v470 = vld [vmem:[%s427 + $0x70] sm:$0xf]
      %v471 = vld [vmem:[%s427 + $0x74] sm:$0xf]
      %v472 = vld [vmem:[%s427 + $0x78] sm:$0xf]
      %v473 = vld [vmem:[%s427 + $0x7c] sm:$0xf]
      %v474 = vunpack.c.l.bf16 %v442
      %v475 = vunpack.c.l.bf16 %v443
      %v476 = vunpack.c.l.bf16 %v444
      %v477 = vunpack.c.l.bf16 %v445
      %v478 = vunpack.c.l.bf16 %v446
      %v479 = vunpack.c.l.bf16 %v447
      %v480 = vunpack.c.l.bf16 %v448
      %v481 = vunpack.c.l.bf16 %v449
      %v482 = vunpack.c.l.bf16 %v450
      %v483 = vunpack.c.l.bf16 %v451
      %v484 = vunpack.c.l.bf16 %v452
      %v485 = vunpack.c.l.bf16 %v453
      %v486 = vunpack.c.l.bf16 %v454
      %v487 = vunpack.c.l.bf16 %v455
      %v488 = vunpack.c.l.bf16 %v456
      %v489 = vunpack.c.l.bf16 %v457
      %v490 = vunpack.c.l.bf16 %v458
      %v491 = vunpack.c.l.bf16 %v459
      %v492 = vunpack.c.l.bf16 %v460
      %v493 = vunpack.c.l.bf16 %v461
      %v494 = vunpack.c.l.bf16 %v462
      %v495 = vunpack.c.l.bf16 %v463
      %v496 = vunpack.c.l.bf16 %v464
      %v497 = vunpack.c.l.bf16 %v465
      %v498 = vunpack.c.l.bf16 %v466
      %v499 = vunpack.c.l.bf16 %v467
      %v500 = vunpack.c.l.bf16 %v468
      %v501 = vunpack.c.l.bf16 %v469
      %v502 = vunpack.c.l.bf16 %v470
      %v503 = vunpack.c.l.bf16 %v471
      %v504 = vunpack.c.l.bf16 %v472
      %v505 = vunpack.c.l.bf16 %v473
      %v506 = vld [vmem:[%s4] sm:$0xf]
      %v507 = vld [vmem:[%s4 + $0x4] sm:$0xf]
      %v508 = vld [vmem:[%s4 + $0x8] sm:$0xf]
      %v509 = vld [vmem:[%s4 + $0xc] sm:$0xf]
      %v510 = vld [vmem:[%s4 + $0x10] sm:$0xf]
      %v511 = vld [vmem:[%s433] sm:$0xf]
      %v512 = vld [vmem:[%s433 + $0x4] sm:$0xf]
      %v513 = vld [vmem:[%s433 + $0x8] sm:$0xf]
      %v514 = vld [vmem:[%s433 + $0xc] sm:$0xf]
      %v515 = vld [vmem:[%s433 + $0x10] sm:$0xf]
      %v516 = vld [vmem:[%s433 + $0x14] sm:$0xf]
      %v517 = vld [vmem:[%s433 + $0x18] sm:$0xf]
      %v518 = vld [vmem:[%s433 + $0x1c] sm:$0xf]
      %v519 = vld [vmem:[%s433 + $0x20] sm:$0xf]
      %v520 = vld [vmem:[%s433 + $0x24] sm:$0xf]
      %v521 = vld [vmem:[%s433 + $0x28] sm:$0xf]
      %v522 = vld [vmem:[%s433 + $0x2c] sm:$0xf]
      %v523 = vld [vmem:[%s433 + $0x30] sm:$0xf]
      %v524 = vld [vmem:[%s433 + $0x34] sm:$0xf]
      %v525 = vld [vmem:[%s433 + $0x38] sm:$0xf]
      %v526 = vld [vmem:[%s433 + $0x3c] sm:$0xf]
      %v527 = vld [vmem:[%s433 + $0x40] sm:$0xf]
      %v528 = vld [vmem:[%s433 + $0x44] sm:$0xf]
      %v529 = vld [vmem:[%s433 + $0x48] sm:$0xf]
      %v530 = vld [vmem:[%s433 + $0x4c] sm:$0xf]
      %v531 = vld [vmem:[%s433 + $0x50] sm:$0xf]
      %v532 = vld [vmem:[%s433 + $0x54] sm:$0xf]
      %v533 = vld [vmem:[%s433 + $0x58] sm:$0xf]
      %v534 = vld [vmem:[%s433 + $0x5c] sm:$0xf]
      %v535 = vld [vmem:[%s433 + $0x60] sm:$0xf]
      %v536 = vld [vmem:[%s433 + $0x64] sm:$0xf]
      %v537 = vld [vmem:[%s433 + $0x68] sm:$0xf]
      %v538 = vld [vmem:[%s433 + $0x6c] sm:$0xf]
      %v539 = vld [vmem:[%s433 + $0x70] sm:$0xf]
      %v540 = vld [vmem:[%s433 + $0x74] sm:$0xf]
      %v541 = vld [vmem:[%s433 + $0x78] sm:$0xf]
      %v542 = vld [vmem:[%s433 + $0x7c] sm:$0xf]
      %v543 = vld [vmem:[%s5] sm:$0xf]
      %v544 = vld [vmem:[%s5 + $0x4] sm:$0xf]
      %v577 = vunpack.c.l.b16 %v511
      %v578 = vunpack.c.l.b16 %v512
      %v579 = vunpack.c.l.b16 %v513
      %v580 = vunpack.c.l.b16 %v514
      %v581 = vunpack.c.l.b16 %v515
      %v582 = vunpack.c.l.b16 %v516
      %v583 = vunpack.c.l.b16 %v517
      %v584 = vunpack.c.l.b16 %v518
      %v585 = vunpack.c.l.b16 %v519
      %v586 = vunpack.c.l.b16 %v520
      %v587 = vunpack.c.l.b16 %v521
      %v588 = vunpack.c.l.b16 %v522
      %v589 = vunpack.c.l.b16 %v523
      %v590 = vunpack.c.l.b16 %v524
      %v591 = vunpack.c.l.b16 %v525
      %v592 = vunpack.c.l.b16 %v526
      %v593 = vunpack.c.l.b16 %v527
      %v594 = vunpack.c.l.b16 %v528
      %v595 = vunpack.c.l.b16 %v529
      %v596 = vunpack.c.l.b16 %v530
      %v597 = vunpack.c.l.b16 %v531
      %v598 = vunpack.c.l.b16 %v532
      %v599 = vunpack.c.l.b16 %v533
      %v600 = vunpack.c.l.b16 %v534
      %v601 = vunpack.c.l.b16 %v535
      %v602 = vunpack.c.l.b16 %v536
      %v603 = vunpack.c.l.b16 %v537
      %v604 = vunpack.c.l.b16 %v538
      %v605 = vunpack.c.l.b16 %v539
      %v606 = vunpack.c.l.b16 %v540
      %v607 = vunpack.c.l.b16 %v541
      %v608 = vunpack.c.l.b16 %v542
      %v609 = vpack.c.b16 %v578, %v577
      %v610 = vpack.c.b16 %v580, %v579
      %v611 = vpack.c.b16 %v582, %v581
      %v612 = vpack.c.b16 %v584, %v583
      %v613 = vpack.c.b16 %v586, %v585
      %v614 = vpack.c.b16 %v588, %v587
      %v615 = vpack.c.b16 %v590, %v589
      %v616 = vpack.c.b16 %v592, %v591
      %v617 = vpack.c.b16 %v594, %v593
      %v618 = vpack.c.b16 %v596, %v595
      %v619 = vpack.c.b16 %v598, %v597
      %v620 = vpack.c.b16 %v600, %v599
      %v621 = vpack.c.b16 %v602, %v601
      %v622 = vpack.c.b16 %v604, %v603
      %v623 = vpack.c.b16 %v606, %v605
      %v624 = vpack.c.b16 %v608, %v607
      %v627 = vunpack.c.l.b16 %v543
      %v628 = vunpack.c.l.b16 %v544
      %v629 = vpack.c.b16 %v628, %v627
      %vm631 = vcmask 130048
      %v633 = vsel %vm631, %v609, 0
      %v636 = vsel %vm631, %v610, 0
      %v639 = vsel %vm631, %v611, 0
      %v642 = vsel %vm631, %v612, 0
      %v645 = vsel %vm631, %v613, 0
      %v648 = vsel %vm631, %v614, 0
      %v651 = vsel %vm631, %v615, 0
      %v654 = vsel %vm631, %v616, 0
      %v657 = vsel %vm631, %v617, 0
      %v660 = vsel %vm631, %v618, 0
      %v663 = vsel %vm631, %v619, 0
      %v666 = vsel %vm631, %v620, 0
      %v669 = vsel %vm631, %v621, 0
      %v672 = vsel %vm631, %v622, 0
      %v675 = vsel %vm631, %v623, 0
      %v678 = vsel %vm631, %v624, 0
      %680 = vmatprep.subr.bf16.mxu0 0
      %681 = vmatpush1.bf16.msra.mxu0 0
      %682 = vmatprep.subr.bf16.mxu0 0
      %683 = vmatpush1.bf16.msra.mxu0 0
      %684 = vmatprep.subr.bf16.mxu0 0
      %685 = vmatpush1.bf16.msra.mxu0 0
      %686 = vmatprep.subr.bf16.mxu0 0
      %687 = vmatpush1.bf16.msra.mxu0 0
      %688 = vmatprep.subr.bf16.mxu0 0
      %689 = vmatpush1.bf16.msra.mxu0 0
      %690 = vmatprep.subr.bf16.mxu0 0
      %691 = vmatpush1.bf16.msra.mxu0 0
      %692 = vmatprep.subr.bf16.mxu0 0
      %693 = vmatpush1.bf16.msra.mxu0 0
      %694 = vmatprep.subr.bf16.mxu0 0
      %695 = vmatpush1.bf16.msra.mxu0 %v629
      %696 = vmatprep.subr.bf16.mxu0 0
      %697 = vmatpush2.bf16.msra.mxu0 0
      %698 = vmatprep.subr.bf16.mxu0 0
      %699 = vmatpush2.bf16.msra.mxu0 0
      %700 = vmatprep.subr.bf16.mxu0 0
      %701 = vmatpush2.bf16.msra.mxu0 0
      %702 = vmatprep.subr.bf16.mxu0 0
      %703 = vmatpush2.bf16.msra.mxu0 0
      %704 = vmatprep.subr.bf16.mxu0 0
      %705 = vmatpush2.bf16.msra.mxu0 0
      %706 = vmatprep.subr.bf16.mxu0 0
      %707 = vmatpush2.bf16.msra.mxu0 0
      %708 = vmatprep.subr.bf16.mxu0 0
      %709 = vmatpush2.bf16.msra.mxu0 0
      %710 = vmatprep.subr.bf16.mxu0 0
      %711 = vmatpush2.bf16.msra.mxu0 0
      %712 = vmatprep.mubr.bf16.mxu0 0
      %713 = vmatmul.mubr.bf16.gmra.mxu0 %v633
      %v714 = vpop.f32.mrf.mxu0
      %v715 = vadd.f32 0.0, %v714
      %v716 = vpop.f32.mrf.mxu0
      %v717 = vpop.f32.mrf.mxu0
      %v718 = vadd.f32 0.0, %v717
      %v719 = vpop.f32.mrf.mxu0
      %720 = vmatprep.mubr.bf16.mxu0 0
      %721 = vmatmul.mubr.bf16.gmra.mxu0 %v636
      %v722 = vpop.f32.mrf.mxu0
      %v723 = vadd.f32 0.0, %v722
      %v724 = vpop.f32.mrf.mxu0
      %v725 = vpop.f32.mrf.mxu0
      %v726 = vadd.f32 0.0, %v725
      %v727 = vpop.f32.mrf.mxu0
      %728 = vmatprep.mubr.bf16.mxu0 0
      %729 = vmatmul.mubr.bf16.gmra.mxu0 %v639
      %v730 = vpop.f32.mrf.mxu0
      %v731 = vadd.f32 0.0, %v730
      %v732 = vpop.f32.mrf.mxu0
      %v733 = vpop.f32.mrf.mxu0
      %v734 = vadd.f32 0.0, %v733
      %v735 = vpop.f32.mrf.mxu0
      %736 = vmatprep.mubr.bf16.mxu0 0
      %737 = vmatmul.mubr.bf16.gmra.mxu0 %v642
      %v738 = vpop.f32.mrf.mxu0
      %v739 = vadd.f32 0.0, %v738
      %v740 = vpop.f32.mrf.mxu0
      %v741 = vpop.f32.mrf.mxu0
      %v742 = vadd.f32 0.0, %v741
      %v743 = vpop.f32.mrf.mxu0
      %744 = vmatprep.mubr.bf16.mxu0 0
      %745 = vmatmul.mubr.bf16.gmra.mxu0 %v645
      %v746 = vpop.f32.mrf.mxu0
      %v747 = vadd.f32 0.0, %v746
      %v748 = vpop.f32.mrf.mxu0
      %v749 = vpop.f32.mrf.mxu0
      %v750 = vadd.f32 0.0, %v749
      %v751 = vpop.f32.mrf.mxu0
      %752 = vmatprep.mubr.bf16.mxu0 0
      %753 = vmatmul.mubr.bf16.gmra.mxu0 %v648
      %v754 = vpop.f32.mrf.mxu0
      %v755 = vadd.f32 0.0, %v754
      %v756 = vpop.f32.mrf.mxu0
      %v757 = vpop.f32.mrf.mxu0
      %v758 = vadd.f32 0.0, %v757
      %v759 = vpop.f32.mrf.mxu0
      %760 = vmatprep.mubr.bf16.mxu0 0
      %761 = vmatmul.mubr.bf16.gmra.mxu0 %v651
      %v762 = vpop.f32.mrf.mxu0
      %v763 = vadd.f32 0.0, %v762
      %v764 = vpop.f32.mrf.mxu0
      %v765 = vpop.f32.mrf.mxu0
      %v766 = vadd.f32 0.0, %v765
      %v767 = vpop.f32.mrf.mxu0
      %768 = vmatprep.mubr.bf16.mxu0 0
      %769 = vmatmul.mubr.bf16.gmra.mxu0 %v654
      %v770 = vpop.f32.mrf.mxu0
      %v771 = vadd.f32 0.0, %v770
      %v772 = vpop.f32.mrf.mxu0
      %v773 = vpop.f32.mrf.mxu0
      %v774 = vadd.f32 0.0, %v773
      %v775 = vpop.f32.mrf.mxu0
      %776 = vmatprep.mubr.bf16.mxu0 0
      %777 = vmatmul.mubr.bf16.gmra.mxu0 %v657
      %v778 = vpop.f32.mrf.mxu0
      %v779 = vadd.f32 0.0, %v778
      %v780 = vpop.f32.mrf.mxu0
      %v781 = vpop.f32.mrf.mxu0
      %v782 = vadd.f32 0.0, %v781
      %v783 = vpop.f32.mrf.mxu0
      %784 = vmatprep.mubr.bf16.mxu0 0
      %785 = vmatmul.mubr.bf16.gmra.mxu0 %v660
      %v786 = vpop.f32.mrf.mxu0
      %v787 = vadd.f32 0.0, %v786
      %v788 = vpop.f32.mrf.mxu0
      %v789 = vpop.f32.mrf.mxu0
      %v790 = vadd.f32 0.0, %v789
      %v791 = vpop.f32.mrf.mxu0
      %792 = vmatprep.mubr.bf16.mxu0 0
      %793 = vmatmul.mubr.bf16.gmra.mxu0 %v663
      %v794 = vpop.f32.mrf.mxu0
      %v795 = vadd.f32 0.0, %v794
      %v796 = vpop.f32.mrf.mxu0
      %v797 = vpop.f32.mrf.mxu0
      %v798 = vadd.f32 0.0, %v797
      %v799 = vpop.f32.mrf.mxu0
      %800 = vmatprep.mubr.bf16.mxu0 0
      %801 = vmatmul.mubr.bf16.gmra.mxu0 %v666
      %v802 = vpop.f32.mrf.mxu0
      %v803 = vadd.f32 0.0, %v802
      %v804 = vpop.f32.mrf.mxu0
      %v805 = vpop.f32.mrf.mxu0
      %v806 = vadd.f32 0.0, %v805
      %v807 = vpop.f32.mrf.mxu0
      %808 = vmatprep.mubr.bf16.mxu0 0
      %809 = vmatmul.mubr.bf16.gmra.mxu0 %v669
      %v810 = vpop.f32.mrf.mxu0
      %v811 = vadd.f32 0.0, %v810
      %v812 = vpop.f32.mrf.mxu0
      %v813 = vpop.f32.mrf.mxu0
      %v814 = vadd.f32 0.0, %v813
      %v815 = vpop.f32.mrf.mxu0
      %816 = vmatprep.mubr.bf16.mxu0 0
      %817 = vmatmul.mubr.bf16.gmra.mxu0 %v672
      %v818 = vpop.f32.mrf.mxu0
      %v819 = vadd.f32 0.0, %v818
      %v820 = vpop.f32.mrf.mxu0
      %v821 = vpop.f32.mrf.mxu0
      %v822 = vadd.f32 0.0, %v821
      %v823 = vpop.f32.mrf.mxu0
      %824 = vmatprep.mubr.bf16.mxu0 0
      %825 = vmatmul.mubr.bf16.gmra.mxu0 %v675
      %v826 = vpop.f32.mrf.mxu0
      %v827 = vadd.f32 0.0, %v826
      %v828 = vpop.f32.mrf.mxu0
      %v829 = vpop.f32.mrf.mxu0
      %v830 = vadd.f32 0.0, %v829
      %v831 = vpop.f32.mrf.mxu0
      %832 = vmatprep.mubr.bf16.mxu0 0
      %833 = vmatmul.mubr.bf16.gmra.mxu0 %v678
      %v834 = vpop.f32.mrf.mxu0
      %v835 = vadd.f32 0.0, %v834
      %v836 = vpop.f32.mrf.mxu0
      %v837 = vpop.f32.mrf.mxu0
      %v838 = vadd.f32 0.0, %v837
      %v839 = vpop.f32.mrf.mxu0
      %840 = vdwg.mxu0
      %v873 = vunpack.c.l.b16 %v442
      %v874 = vunpack.c.l.b16 %v443
      %v875 = vunpack.c.l.b16 %v444
      %v876 = vunpack.c.l.b16 %v445
      %v877 = vunpack.c.l.b16 %v446
      %v878 = vunpack.c.l.b16 %v447
      %v879 = vunpack.c.l.b16 %v448
      %v880 = vunpack.c.l.b16 %v449
      %v881 = vunpack.c.l.b16 %v450
      %v882 = vunpack.c.l.b16 %v451
      %v883 = vunpack.c.l.b16 %v452
      %v884 = vunpack.c.l.b16 %v453
      %v885 = vunpack.c.l.b16 %v454
      %v886 = vunpack.c.l.b16 %v455
      %v887 = vunpack.c.l.b16 %v456
      %v888 = vunpack.c.l.b16 %v457
      %v889 = vunpack.c.l.b16 %v458
      %v890 = vunpack.c.l.b16 %v459
      %v891 = vunpack.c.l.b16 %v460
      %v892 = vunpack.c.l.b16 %v461
      %v893 = vunpack.c.l.b16 %v462
      %v894 = vunpack.c.l.b16 %v463
      %v895 = vunpack.c.l.b16 %v464
      %v896 = vunpack.c.l.b16 %v465
      %v897 = vunpack.c.l.b16 %v466
      %v898 = vunpack.c.l.b16 %v467
      %v899 = vunpack.c.l.b16 %v468
      %v900 = vunpack.c.l.b16 %v469
      %v901 = vunpack.c.l.b16 %v470
      %v902 = vunpack.c.l.b16 %v471
      %v903 = vunpack.c.l.b16 %v472
      %v904 = vunpack.c.l.b16 %v473
      %v905 = vpack.c.b16 %v874, %v873
      %v906 = vpack.c.b16 %v876, %v875
      %v907 = vpack.c.b16 %v878, %v877
      %v908 = vpack.c.b16 %v880, %v879
      %v909 = vpack.c.b16 %v882, %v881
      %v910 = vpack.c.b16 %v884, %v883
      %v911 = vpack.c.b16 %v886, %v885
      %v912 = vpack.c.b16 %v888, %v887
      %v913 = vpack.c.b16 %v890, %v889
      %v914 = vpack.c.b16 %v892, %v891
      %v915 = vpack.c.b16 %v894, %v893
      %v916 = vpack.c.b16 %v896, %v895
      %v917 = vpack.c.b16 %v898, %v897
      %v918 = vpack.c.b16 %v900, %v899
      %v919 = vpack.c.b16 %v902, %v901
      %v920 = vpack.c.b16 %v904, %v903
      %v926 = vunpack.c.l.b16 %v506
      %v927 = vunpack.c.l.b16 %v507
      %v928 = vunpack.c.l.b16 %v508
      %v929 = vunpack.c.l.b16 %v509
      %v930 = vunpack.c.l.b16 %v510
      %v931 = vpack.c.b16 %v927, %v926
      %v932 = vpack.c.b16 %v929, %v928
      %v933 = vpack.c.b16 %v930, %v930
      %vm936 = vcmask 326656
      %v938 = vsel %vm936, %v905, 0
      %v941 = vsel %vm936, %v906, 0
      %v944 = vsel %vm936, %v907, 0
      %v947 = vsel %vm936, %v908, 0
      %v950 = vsel %vm936, %v909, 0
      %v953 = vsel %vm936, %v910, 0
      %v956 = vsel %vm936, %v911, 0
      %v959 = vsel %vm936, %v912, 0
      %v962 = vsel %vm936, %v913, 0
      %v965 = vsel %vm936, %v914, 0
      %v968 = vsel %vm936, %v915, 0
      %v971 = vsel %vm936, %v916, 0
      %v974 = vsel %vm936, %v917, 0
      %v977 = vsel %vm936, %v918, 0
      %v980 = vsel %vm936, %v919, 0
      %v983 = vsel %vm936, %v920, 0
      %vm985 = vcmask 1043456
      %v987 = vsel %vm985, %v933, 0
      %989 = vmatprep.subr.bf16.mxu0 0
      %990 = vmatpush1.bf16.msra.mxu0 0
      %991 = vmatprep.subr.bf16.mxu0 0
      %992 = vmatpush1.bf16.msra.mxu0 0
      %993 = vmatprep.subr.bf16.mxu0 0
      %994 = vmatpush1.bf16.msra.mxu0 0
      %995 = vmatprep.subr.bf16.mxu0 0
      %996 = vmatpush1.bf16.msra.mxu0 0
      %997 = vmatprep.subr.bf16.mxu0 0
      %998 = vmatpush1.bf16.msra.mxu0 0
      %999 = vmatprep.subr.bf16.mxu0 0
      %1000 = vmatpush1.bf16.msra.mxu0 %v987
      %1001 = vmatprep.subr.bf16.mxu0 0
      %1002 = vmatpush1.bf16.msra.mxu0 %v932
      %1003 = vmatprep.subr.bf16.mxu0 0
      %1004 = vmatpush1.bf16.msra.mxu0 %v931
      %1005 = vmatprep.subr.bf16.mxu0 0
      %1006 = vmatpush2.bf16.msra.mxu0 0
      %1007 = vmatprep.subr.bf16.mxu0 0
      %1008 = vmatpush2.bf16.msra.mxu0 0
      %1009 = vmatprep.subr.bf16.mxu0 0
      %1010 = vmatpush2.bf16.msra.mxu0 0
      %1011 = vmatprep.subr.bf16.mxu0 0
      %1012 = vmatpush2.bf16.msra.mxu0 0
      %1013 = vmatprep.subr.bf16.mxu0 0
      %1014 = vmatpush2.bf16.msra.mxu0 0
      %1015 = vmatprep.subr.bf16.mxu0 0
      %1016 = vmatpush2.bf16.msra.mxu0 0
      %1017 = vmatprep.subr.bf16.mxu0 0
      %1018 = vmatpush2.bf16.msra.mxu0 0
      %1019 = vmatprep.subr.bf16.mxu0 0
      %1020 = vmatpush2.bf16.msra.mxu0 0
      %1021 = vmatprep.mubr.bf16.mxu0 0
      %1022 = vmatmul.mubr.bf16.gmra.mxu0 %v938
      %v1023 = vpop.f32.mrf.mxu0
      %v1024 = vadd.f32 %v715, %v1023
      %v1025 = vpop.f32.mrf.mxu0
      %v1026 = vpop.f32.mrf.mxu0
      %v1027 = vadd.f32 %v718, %v1026
      %v1028 = vpop.f32.mrf.mxu0
      %1029 = vmatprep.mubr.bf16.mxu0 0
      %1030 = vmatmul.mubr.bf16.gmra.mxu0 %v941
      %v1031 = vpop.f32.mrf.mxu0
      %v1032 = vadd.f32 %v723, %v1031
      %v1033 = vpop.f32.mrf.mxu0
      %v1034 = vpop.f32.mrf.mxu0
      %v1035 = vadd.f32 %v726, %v1034
      %v1036 = vpop.f32.mrf.mxu0
      %1037 = vmatprep.mubr.bf16.mxu0 0
      %1038 = vmatmul.mubr.bf16.gmra.mxu0 %v944
      %v1039 = vpop.f32.mrf.mxu0
      %v1040 = vadd.f32 %v731, %v1039
      %v1041 = vpop.f32.mrf.mxu0
      %v1042 = vpop.f32.mrf.mxu0
      %v1043 = vadd.f32 %v734, %v1042
      %v1044 = vpop.f32.mrf.mxu0
      %1045 = vmatprep.mubr.bf16.mxu0 0
      %1046 = vmatmul.mubr.bf16.gmra.mxu0 %v947
      %v1047 = vpop.f32.mrf.mxu0
      %v1048 = vadd.f32 %v739, %v1047
      %v1049 = vpop.f32.mrf.mxu0
      %v1050 = vpop.f32.mrf.mxu0
      %v1051 = vadd.f32 %v742, %v1050
      %v1052 = vpop.f32.mrf.mxu0
      %1053 = vmatprep.mubr.bf16.mxu0 0
      %1054 = vmatmul.mubr.bf16.gmra.mxu0 %v950
      %v1055 = vpop.f32.mrf.mxu0
      %v1056 = vadd.f32 %v747, %v1055
      %v1057 = vpop.f32.mrf.mxu0
      %v1058 = vpop.f32.mrf.mxu0
      %v1059 = vadd.f32 %v750, %v1058
      %v1060 = vpop.f32.mrf.mxu0
      %1061 = vmatprep.mubr.bf16.mxu0 0
      %1062 = vmatmul.mubr.bf16.gmra.mxu0 %v953
      %v1063 = vpop.f32.mrf.mxu0
      %v1064 = vadd.f32 %v755, %v1063
      %v1065 = vpop.f32.mrf.mxu0
      %v1066 = vpop.f32.mrf.mxu0
      %v1067 = vadd.f32 %v758, %v1066
      %v1068 = vpop.f32.mrf.mxu0
      %1069 = vmatprep.mubr.bf16.mxu0 0
      %1070 = vmatmul.mubr.bf16.gmra.mxu0 %v956
      %v1071 = vpop.f32.mrf.mxu0
      %v1072 = vadd.f32 %v763, %v1071
      %v1073 = vpop.f32.mrf.mxu0
      %v1074 = vpop.f32.mrf.mxu0
      %v1075 = vadd.f32 %v766, %v1074
      %v1076 = vpop.f32.mrf.mxu0
      %1077 = vmatprep.mubr.bf16.mxu0 0
      %1078 = vmatmul.mubr.bf16.gmra.mxu0 %v959
      %v1079 = vpop.f32.mrf.mxu0
      %v1080 = vadd.f32 %v771, %v1079
      %v1081 = vpop.f32.mrf.mxu0
      %v1082 = vpop.f32.mrf.mxu0
      %v1083 = vadd.f32 %v774, %v1082
      %v1084 = vpop.f32.mrf.mxu0
      %1085 = vmatprep.mubr.bf16.mxu0 0
      %1086 = vmatmul.mubr.bf16.gmra.mxu0 %v962
      %v1087 = vpop.f32.mrf.mxu0
      %v1088 = vadd.f32 %v779, %v1087
      %v1089 = vpop.f32.mrf.mxu0
      %v1090 = vpop.f32.mrf.mxu0
      %v1091 = vadd.f32 %v782, %v1090
      %v1092 = vpop.f32.mrf.mxu0
      %1093 = vmatprep.mubr.bf16.mxu0 0
      %1094 = vmatmul.mubr.bf16.gmra.mxu0 %v965
      %v1095 = vpop.f32.mrf.mxu0
      %v1096 = vadd.f32 %v787, %v1095
      %v1097 = vpop.f32.mrf.mxu0
      %v1098 = vpop.f32.mrf.mxu0
      %v1099 = vadd.f32 %v790, %v1098
      %v1100 = vpop.f32.mrf.mxu0
      %1101 = vmatprep.mubr.bf16.mxu0 0
      %1102 = vmatmul.mubr.bf16.gmra.mxu0 %v968
      %v1103 = vpop.f32.mrf.mxu0
      %v1104 = vadd.f32 %v795, %v1103
      %v1105 = vpop.f32.mrf.mxu0
      %v1106 = vpop.f32.mrf.mxu0
      %v1107 = vadd.f32 %v798, %v1106
      %v1108 = vpop.f32.mrf.mxu0
      %1109 = vmatprep.mubr.bf16.mxu0 0
      %1110 = vmatmul.mubr.bf16.gmra.mxu0 %v971
      %v1111 = vpop.f32.mrf.mxu0
      %v1112 = vadd.f32 %v803, %v1111
      %v1113 = vpop.f32.mrf.mxu0
      %v1114 = vpop.f32.mrf.mxu0
      %v1115 = vadd.f32 %v806, %v1114
      %v1116 = vpop.f32.mrf.mxu0
      %1117 = vmatprep.mubr.bf16.mxu0 0
      %1118 = vmatmul.mubr.bf16.gmra.mxu0 %v974
      %v1119 = vpop.f32.mrf.mxu0
      %v1120 = vadd.f32 %v811, %v1119
      %v1121 = vpop.f32.mrf.mxu0
      %v1122 = vpop.f32.mrf.mxu0
      %v1123 = vadd.f32 %v814, %v1122
      %v1124 = vpop.f32.mrf.mxu0
      %1125 = vmatprep.mubr.bf16.mxu0 0
      %1126 = vmatmul.mubr.bf16.gmra.mxu0 %v977
      %v1127 = vpop.f32.mrf.mxu0
      %v1128 = vadd.f32 %v819, %v1127
      %v1129 = vpop.f32.mrf.mxu0
      %v1130 = vpop.f32.mrf.mxu0
      %v1131 = vadd.f32 %v822, %v1130
      %v1132 = vpop.f32.mrf.mxu0
      %1133 = vmatprep.mubr.bf16.mxu0 0
      %1134 = vmatmul.mubr.bf16.gmra.mxu0 %v980
      %v1135 = vpop.f32.mrf.mxu0
      %v1136 = vadd.f32 %v827, %v1135
      %v1137 = vpop.f32.mrf.mxu0
      %v1138 = vpop.f32.mrf.mxu0
      %v1139 = vadd.f32 %v830, %v1138
      %v1140 = vpop.f32.mrf.mxu0
      %1141 = vmatprep.mubr.bf16.mxu0 0
      %1142 = vmatmul.mubr.bf16.gmra.mxu0 %v983
      %v1143 = vpop.f32.mrf.mxu0
      %v1144 = vadd.f32 %v835, %v1143
      %v1145 = vpop.f32.mrf.mxu0
      %v1146 = vpop.f32.mrf.mxu0
      %v1147 = vadd.f32 %v838, %v1146
      %v1148 = vpop.f32.mrf.mxu0
      %1149 = vdwg.mxu0
      %v1150 = vld [vmem:[%s6] sm:$0x1]
      %v1152 = vlaneseq
      %v1153 = vshrl.u32 %v1152, 7
      %v1154 = vsub.s32 0, %v1153
      %v1155 = vrot.slane %v1150, %v1154
      %v1157 = vadd.f32 %v1024, %v1155
      %v1158 = vadd.f32 %v1027, %v1155
      %v1159 = vadd.f32 %v1032, %v1155
      %v1160 = vadd.f32 %v1035, %v1155
      %v1161 = vadd.f32 %v1040, %v1155
      %v1162 = vadd.f32 %v1043, %v1155
      %v1163 = vadd.f32 %v1048, %v1155
      %v1164 = vadd.f32 %v1051, %v1155
      %v1165 = vadd.f32 %v1056, %v1155
      %v1166 = vadd.f32 %v1059, %v1155
      %v1167 = vadd.f32 %v1064, %v1155
      %v1168 = vadd.f32 %v1067, %v1155
      %v1169 = vadd.f32 %v1072, %v1155
      %v1170 = vadd.f32 %v1075, %v1155
      %v1171 = vadd.f32 %v1080, %v1155
      %v1172 = vadd.f32 %v1083, %v1155
      %v1173 = vadd.f32 %v1088, %v1155
      %v1174 = vadd.f32 %v1091, %v1155
      %v1175 = vadd.f32 %v1096, %v1155
      %v1176 = vadd.f32 %v1099, %v1155
      %v1177 = vadd.f32 %v1104, %v1155
      %v1178 = vadd.f32 %v1107, %v1155
      %v1179 = vadd.f32 %v1112, %v1155
      %v1180 = vadd.f32 %v1115, %v1155
      %v1181 = vadd.f32 %v1120, %v1155
      %v1182 = vadd.f32 %v1123, %v1155
      %v1183 = vadd.f32 %v1128, %v1155
      %v1184 = vadd.f32 %v1131, %v1155
      %v1185 = vadd.f32 %v1136, %v1155
      %v1186 = vadd.f32 %v1139, %v1155
      %v1187 = vadd.f32 %v1144, %v1155
      %v1188 = vadd.f32 %v1147, %v1155
      %v1189 = vmax.f32 %v1157, 0.0
      %v1190 = vmax.f32 %v1158, 0.0
      %v1191 = vmax.f32 %v1159, 0.0
      %v1192 = vmax.f32 %v1160, 0.0
      %v1193 = vmax.f32 %v1161, 0.0
      %v1194 = vmax.f32 %v1162, 0.0
      %v1195 = vmax.f32 %v1163, 0.0
      %v1196 = vmax.f32 %v1164, 0.0
      %v1197 = vmax.f32 %v1165, 0.0
      %v1198 = vmax.f32 %v1166, 0.0
      %v1199 = vmax.f32 %v1167, 0.0
      %v1200 = vmax.f32 %v1168, 0.0
      %v1201 = vmax.f32 %v1169, 0.0
      %v1202 = vmax.f32 %v1170, 0.0
      %v1203 = vmax.f32 %v1171, 0.0
      %v1204 = vmax.f32 %v1172, 0.0
      %v1205 = vmax.f32 %v1173, 0.0
      %v1206 = vmax.f32 %v1174, 0.0
      %v1207 = vmax.f32 %v1175, 0.0
      %v1208 = vmax.f32 %v1176, 0.0
      %v1209 = vmax.f32 %v1177, 0.0
      %v1210 = vmax.f32 %v1178, 0.0
      %v1211 = vmax.f32 %v1179, 0.0
      %v1212 = vmax.f32 %v1180, 0.0
      %v1213 = vmax.f32 %v1181, 0.0
      %v1214 = vmax.f32 %v1182, 0.0
      %v1215 = vmax.f32 %v1183, 0.0
      %v1216 = vmax.f32 %v1184, 0.0
      %v1217 = vmax.f32 %v1185, 0.0
      %v1218 = vmax.f32 %v1186, 0.0
      %v1219 = vmax.f32 %v1187, 0.0
      %v1220 = vmax.f32 %v1188, 0.0
      %v1221 = vpack.c.bf16 %v1190, %v1189
      %v1222 = vpack.c.bf16 %v1192, %v1191
      %v1223 = vpack.c.bf16 %v1194, %v1193
      %v1224 = vpack.c.bf16 %v1196, %v1195
      %v1225 = vpack.c.bf16 %v1198, %v1197
      %v1226 = vpack.c.bf16 %v1200, %v1199
      %v1227 = vpack.c.bf16 %v1202, %v1201
      %v1228 = vpack.c.bf16 %v1204, %v1203
      %v1229 = vpack.c.bf16 %v1206, %v1205
      %v1230 = vpack.c.bf16 %v1208, %v1207
      %v1231 = vpack.c.bf16 %v1210, %v1209
      %v1232 = vpack.c.bf16 %v1212, %v1211
      %v1233 = vpack.c.bf16 %v1214, %v1213
      %v1234 = vpack.c.bf16 %v1216, %v1215
      %v1235 = vpack.c.bf16 %v1218, %v1217
      %v1236 = vpack.c.bf16 %v1220, %v1219
      %v1237 = vld [vmem:[%s7] sm:$0xf]
      %v1238 = vld [vmem:[%s7 + $0x4] sm:$0xf]
      %v1239 = vld [vmem:[%s7 + $0x8] sm:$0xf]
      %v1240 = vld [vmem:[%s7 + $0xc] sm:$0xf]
      %v1241 = vld [vmem:[%s8] sm:$0x1]
      %v1243 = vlaneseq
      %v1244 = vshrl.u32 %v1243, 7
      %v1245 = vsub.s32 0, %v1244
      %v1246 = vrot.slane %v1241, %v1245
      %v1252 = vunpack.c.l.b16 %v1237
      %v1253 = vunpack.c.l.b16 %v1238
      %v1254 = vunpack.c.l.b16 %v1239
      %v1255 = vunpack.c.l.b16 %v1240
      %v1256 = vpack.c.b16 %v1253, %v1252
      %v1257 = vpack.c.b16 %v1255, %v1254
      %vm1260 = vcmask 261120
      %v1262 = vsel %vm1260, %v1221, 0
      %v1265 = vsel %vm1260, %v1222, 0
      %v1268 = vsel %vm1260, %v1223, 0
      %v1271 = vsel %vm1260, %v1224, 0
      %v1274 = vsel %vm1260, %v1225, 0
      %v1277 = vsel %vm1260, %v1226, 0
      %v1280 = vsel %vm1260, %v1227, 0
      %v1283 = vsel %vm1260, %v1228, 0
      %v1286 = vsel %vm1260, %v1229, 0
      %v1289 = vsel %vm1260, %v1230, 0
      %v1292 = vsel %vm1260, %v1231, 0
      %v1295 = vsel %vm1260, %v1232, 0
      %v1298 = vsel %vm1260, %v1233, 0
      %v1301 = vsel %vm1260, %v1234, 0
      %v1304 = vsel %vm1260, %v1235, 0
      %v1307 = vsel %vm1260, %v1236, 0
      %1309 = vmatprep.subr.bf16.mxu0 0
      %1310 = vmatpush1.bf16.msra.mxu0 0
      %1311 = vmatprep.subr.bf16.mxu0 0
      %1312 = vmatpush1.bf16.msra.mxu0 0
      %1313 = vmatprep.subr.bf16.mxu0 0
      %1314 = vmatpush1.bf16.msra.mxu0 0
      %1315 = vmatprep.subr.bf16.mxu0 0
      %1316 = vmatpush1.bf16.msra.mxu0 0
      %1317 = vmatprep.subr.bf16.mxu0 0
      %1318 = vmatpush1.bf16.msra.mxu0 0
      %1319 = vmatprep.subr.bf16.mxu0 0
      %1320 = vmatpush1.bf16.msra.mxu0 0
      %1321 = vmatprep.subr.bf16.mxu0 0
      %1322 = vmatpush1.bf16.msra.mxu0 %v1257
      %1323 = vmatprep.subr.bf16.mxu0 0
      %1324 = vmatpush1.bf16.msra.mxu0 %v1256
      %1325 = vmatprep.subr.bf16.mxu0 0
      %1326 = vmatpush2.bf16.msra.mxu0 0
      %1327 = vmatprep.subr.bf16.mxu0 0
      %1328 = vmatpush2.bf16.msra.mxu0 0
      %1329 = vmatprep.subr.bf16.mxu0 0
      %1330 = vmatpush2.bf16.msra.mxu0 0
      %1331 = vmatprep.subr.bf16.mxu0 0
      %1332 = vmatpush2.bf16.msra.mxu0 0
      %1333 = vmatprep.subr.bf16.mxu0 0
      %1334 = vmatpush2.bf16.msra.mxu0 0
      %1335 = vmatprep.subr.bf16.mxu0 0
      %1336 = vmatpush2.bf16.msra.mxu0 0
      %1337 = vmatprep.subr.bf16.mxu0 0
      %1338 = vmatpush2.bf16.msra.mxu0 0
      %1339 = vmatprep.subr.bf16.mxu0 0
      %1340 = vmatpush2.bf16.msra.mxu0 0
      %1341 = vmatprep.mubr.bf16.mxu0 0
      %1342 = vmatmul.mubr.bf16.gmra.mxu0 %v1262
      %v1343 = vpop.f32.mrf.mxu0
      %v1344 = vadd.f32 %v1246, %v1343
      %v1345 = vpop.f32.mrf.mxu0
      %v1346 = vpop.f32.mrf.mxu0
      %v1347 = vadd.f32 %v1246, %v1346
      %v1348 = vpop.f32.mrf.mxu0
      %1349 = vmatprep.mubr.bf16.mxu0 0
      %1350 = vmatmul.mubr.bf16.gmra.mxu0 %v1265
      %v1351 = vpop.f32.mrf.mxu0
      %v1352 = vadd.f32 %v1246, %v1351
      %v1353 = vpop.f32.mrf.mxu0
      %v1354 = vpop.f32.mrf.mxu0
      %v1355 = vadd.f32 %v1246, %v1354
      %v1356 = vpop.f32.mrf.mxu0
      %1357 = vmatprep.mubr.bf16.mxu0 0
      %1358 = vmatmul.mubr.bf16.gmra.mxu0 %v1268
      %v1359 = vpop.f32.mrf.mxu0
      %v1360 = vadd.f32 %v1246, %v1359
      %v1361 = vpop.f32.mrf.mxu0
      %v1362 = vpop.f32.mrf.mxu0
      %v1363 = vadd.f32 %v1246, %v1362
      %v1364 = vpop.f32.mrf.mxu0
      %1365 = vmatprep.mubr.bf16.mxu0 0
      %1366 = vmatmul.mubr.bf16.gmra.mxu0 %v1271
      %v1367 = vpop.f32.mrf.mxu0
      %v1368 = vadd.f32 %v1246, %v1367
      %v1369 = vpop.f32.mrf.mxu0
      %v1370 = vpop.f32.mrf.mxu0
      %v1371 = vadd.f32 %v1246, %v1370
      %v1372 = vpop.f32.mrf.mxu0
      %1373 = vmatprep.mubr.bf16.mxu0 0
      %1374 = vmatmul.mubr.bf16.gmra.mxu0 %v1274
      %v1375 = vpop.f32.mrf.mxu0
      %v1376 = vadd.f32 %v1246, %v1375
      %v1377 = vpop.f32.mrf.mxu0
      %v1378 = vpop.f32.mrf.mxu0
      %v1379 = vadd.f32 %v1246, %v1378
      %v1380 = vpop.f32.mrf.mxu0
      %1381 = vmatprep.mubr.bf16.mxu0 0
      %1382 = vmatmul.mubr.bf16.gmra.mxu0 %v1277
      %v1383 = vpop.f32.mrf.mxu0
      %v1384 = vadd.f32 %v1246, %v1383
      %v1385 = vpop.f32.mrf.mxu0
      %v1386 = vpop.f32.mrf.mxu0
      %v1387 = vadd.f32 %v1246, %v1386
      %v1388 = vpop.f32.mrf.mxu0
      %1389 = vmatprep.mubr.bf16.mxu0 0
      %1390 = vmatmul.mubr.bf16.gmra.mxu0 %v1280
      %v1391 = vpop.f32.mrf.mxu0
      %v1392 = vadd.f32 %v1246, %v1391
      %v1393 = vpop.f32.mrf.mxu0
      %v1394 = vpop.f32.mrf.mxu0
      %v1395 = vadd.f32 %v1246, %v1394
      %v1396 = vpop.f32.mrf.mxu0
      %1397 = vmatprep.mubr.bf16.mxu0 0
      %1398 = vmatmul.mubr.bf16.gmra.mxu0 %v1283
      %v1399 = vpop.f32.mrf.mxu0
      %v1400 = vadd.f32 %v1246, %v1399
      %v1401 = vpop.f32.mrf.mxu0
      %v1402 = vpop.f32.mrf.mxu0
      %v1403 = vadd.f32 %v1246, %v1402
      %v1404 = vpop.f32.mrf.mxu0
      %1405 = vmatprep.mubr.bf16.mxu0 0
      %1406 = vmatmul.mubr.bf16.gmra.mxu0 %v1286
      %v1407 = vpop.f32.mrf.mxu0
      %v1408 = vadd.f32 %v1246, %v1407
      %v1409 = vpop.f32.mrf.mxu0
      %v1410 = vpop.f32.mrf.mxu0
      %v1411 = vadd.f32 %v1246, %v1410
      %v1412 = vpop.f32.mrf.mxu0
      %1413 = vmatprep.mubr.bf16.mxu0 0
      %1414 = vmatmul.mubr.bf16.gmra.mxu0 %v1289
      %v1415 = vpop.f32.mrf.mxu0
      %v1416 = vadd.f32 %v1246, %v1415
      %v1417 = vpop.f32.mrf.mxu0
      %v1418 = vpop.f32.mrf.mxu0
      %v1419 = vadd.f32 %v1246, %v1418
      %v1420 = vpop.f32.mrf.mxu0
      %1421 = vmatprep.mubr.bf16.mxu0 0
      %1422 = vmatmul.mubr.bf16.gmra.mxu0 %v1292
      %v1423 = vpop.f32.mrf.mxu0
      %v1424 = vadd.f32 %v1246, %v1423
      %v1425 = vpop.f32.mrf.mxu0
      %v1426 = vpop.f32.mrf.mxu0
      %v1427 = vadd.f32 %v1246, %v1426
      %v1428 = vpop.f32.mrf.mxu0
      %1429 = vmatprep.mubr.bf16.mxu0 0
      %1430 = vmatmul.mubr.bf16.gmra.mxu0 %v1295
      %v1431 = vpop.f32.mrf.mxu0
      %v1432 = vadd.f32 %v1246, %v1431
      %v1433 = vpop.f32.mrf.mxu0
      %v1434 = vpop.f32.mrf.mxu0
      %v1435 = vadd.f32 %v1246, %v1434
      %v1436 = vpop.f32.mrf.mxu0
      %1437 = vmatprep.mubr.bf16.mxu0 0
      %1438 = vmatmul.mubr.bf16.gmra.mxu0 %v1298
      %v1439 = vpop.f32.mrf.mxu0
      %v1440 = vadd.f32 %v1246, %v1439
      %v1441 = vpop.f32.mrf.mxu0
      %v1442 = vpop.f32.mrf.mxu0
      %v1443 = vadd.f32 %v1246, %v1442
      %v1444 = vpop.f32.mrf.mxu0
      %1445 = vmatprep.mubr.bf16.mxu0 0
      %1446 = vmatmul.mubr.bf16.gmra.mxu0 %v1301
      %v1447 = vpop.f32.mrf.mxu0
      %v1448 = vadd.f32 %v1246, %v1447
      %v1449 = vpop.f32.mrf.mxu0
      %v1450 = vpop.f32.mrf.mxu0
      %v1451 = vadd.f32 %v1246, %v1450
      %v1452 = vpop.f32.mrf.mxu0
      %1453 = vmatprep.mubr.bf16.mxu0 0
      %1454 = vmatmul.mubr.bf16.gmra.mxu0 %v1304
      %v1455 = vpop.f32.mrf.mxu0
      %v1456 = vadd.f32 %v1246, %v1455
      %v1457 = vpop.f32.mrf.mxu0
      %v1458 = vpop.f32.mrf.mxu0
      %v1459 = vadd.f32 %v1246, %v1458
      %v1460 = vpop.f32.mrf.mxu0
      %1461 = vmatprep.mubr.bf16.mxu0 0
      %1462 = vmatmul.mubr.bf16.gmra.mxu0 %v1307
      %v1463 = vpop.f32.mrf.mxu0
      %v1464 = vadd.f32 %v1246, %v1463
      %v1465 = vpop.f32.mrf.mxu0
      %v1466 = vpop.f32.mrf.mxu0
      %v1467 = vadd.f32 %v1246, %v1466
      %v1468 = vpop.f32.mrf.mxu0
      %1469 = vdwg.mxu0
      %v1470 = vmax.f32 %v1344, 0.0
      %v1471 = vmax.f32 %v1347, 0.0
      %v1472 = vmax.f32 %v1352, 0.0
      %v1473 = vmax.f32 %v1355, 0.0
      %v1474 = vmax.f32 %v1360, 0.0
      %v1475 = vmax.f32 %v1363, 0.0
      %v1476 = vmax.f32 %v1368, 0.0
      %v1477 = vmax.f32 %v1371, 0.0
      %v1478 = vmax.f32 %v1376, 0.0
      %v1479 = vmax.f32 %v1379, 0.0
      %v1480 = vmax.f32 %v1384, 0.0
      %v1481 = vmax.f32 %v1387, 0.0
      %v1482 = vmax.f32 %v1392, 0.0
      %v1483 = vmax.f32 %v1395, 0.0
      %v1484 = vmax.f32 %v1400, 0.0
      %v1485 = vmax.f32 %v1403, 0.0
      %v1486 = vmax.f32 %v1408, 0.0
      %v1487 = vmax.f32 %v1411, 0.0
      %v1488 = vmax.f32 %v1416, 0.0
      %v1489 = vmax.f32 %v1419, 0.0
      %v1490 = vmax.f32 %v1424, 0.0
      %v1491 = vmax.f32 %v1427, 0.0
      %v1492 = vmax.f32 %v1432, 0.0
      %v1493 = vmax.f32 %v1435, 0.0
      %v1494 = vmax.f32 %v1440, 0.0
      %v1495 = vmax.f32 %v1443, 0.0
      %v1496 = vmax.f32 %v1448, 0.0
      %v1497 = vmax.f32 %v1451, 0.0
      %v1498 = vmax.f32 %v1456, 0.0
      %v1499 = vmax.f32 %v1459, 0.0
      %v1500 = vmax.f32 %v1464, 0.0
      %v1501 = vmax.f32 %v1467, 0.0
      %v1502 = vld [vmem:[%s2] sm:$0xf]
      %v1503 = vld [vmem:[%s2 + $0x4] sm:$0xf]
      %v1504 = vld [vmem:[%s2 + $0x8] sm:$0xf]
      %v1505 = vld [vmem:[%s2 + $0xc] sm:$0xf]
      %v1506 = vld [vmem:[%s2 + $0x10] sm:$0xf]
      %v1507 = vld [vmem:[%s3] sm:$0x1]
      %v1509 = vlaneseq
      %v1510 = vshrl.u32 %v1509, 7
      %v1511 = vsub.s32 0, %v1510
      %v1512 = vrot.slane %v1507, %v1511
      %v1519 = vunpack.c.l.b16 %v1502
      %v1520 = vunpack.c.l.b16 %v1503
      %v1521 = vunpack.c.l.b16 %v1504
      %v1522 = vunpack.c.l.b16 %v1505
      %v1523 = vunpack.c.l.b16 %v1506
      %v1524 = vpack.c.b16 %v1520, %v1519
      %v1525 = vpack.c.b16 %v1522, %v1521
      %v1526 = vpack.c.b16 %v1523, %v1523
      %v1530 = vsel %vm985, %v1526, 0
      %1532 = vmatprep.subr.bf16.mxu0 0
      %1533 = vmatpush1.bf16.msra.mxu0 0
      %1534 = vmatprep.subr.bf16.mxu0 0
      %1535 = vmatpush1.bf16.msra.mxu0 0
      %1536 = vmatprep.subr.bf16.mxu0 0
      %1537 = vmatpush1.bf16.msra.mxu0 0
      %1538 = vmatprep.subr.bf16.mxu0 0
      %1539 = vmatpush1.bf16.msra.mxu0 0
      %1540 = vmatprep.subr.bf16.mxu0 0
      %1541 = vmatpush1.bf16.msra.mxu0 0
      %1542 = vmatprep.subr.bf16.mxu0 0
      %1543 = vmatpush1.bf16.msra.mxu0 %v1530
      %1544 = vmatprep.subr.bf16.mxu0 0
      %1545 = vmatpush1.bf16.msra.mxu0 %v1525
      %1546 = vmatprep.subr.bf16.mxu0 0
      %1547 = vmatpush1.bf16.msra.mxu0 %v1524
      %1548 = vmatprep.subr.bf16.mxu0 0
      %1549 = vmatpush2.bf16.msra.mxu0 0
      %1550 = vmatprep.subr.bf16.mxu0 0
      %1551 = vmatpush2.bf16.msra.mxu0 0
      %1552 = vmatprep.subr.bf16.mxu0 0
      %1553 = vmatpush2.bf16.msra.mxu0 0
      %1554 = vmatprep.subr.bf16.mxu0 0
      %1555 = vmatpush2.bf16.msra.mxu0 0
      %1556 = vmatprep.subr.bf16.mxu0 0
      %1557 = vmatpush2.bf16.msra.mxu0 0
      %1558 = vmatprep.subr.bf16.mxu0 0
      %1559 = vmatpush2.bf16.msra.mxu0 0
      %1560 = vmatprep.subr.bf16.mxu0 0
      %1561 = vmatpush2.bf16.msra.mxu0 0
      %1562 = vmatprep.subr.bf16.mxu0 0
      %1563 = vmatpush2.bf16.msra.mxu0 0
      %1564 = vmatprep.mubr.bf16.mxu0 0
      %1565 = vmatmul.mubr.bf16.gmra.mxu0 %v938
      %v1566 = vpop.f32.mrf.mxu0
      %v1567 = vadd.f32 %v1512, %v1566
      %v1568 = vpop.f32.mrf.mxu0
      %v1569 = vpop.f32.mrf.mxu0
      %v1570 = vadd.f32 %v1512, %v1569
      %v1571 = vpop.f32.mrf.mxu0
      %1572 = vmatprep.mubr.bf16.mxu0 0
      %1573 = vmatmul.mubr.bf16.gmra.mxu0 %v941
      %v1574 = vpop.f32.mrf.mxu0
      %v1575 = vadd.f32 %v1512, %v1574
      %v1576 = vpop.f32.mrf.mxu0
      %v1577 = vpop.f32.mrf.mxu0
      %v1578 = vadd.f32 %v1512, %v1577
      %v1579 = vpop.f32.mrf.mxu0
      %1580 = vmatprep.mubr.bf16.mxu0 0
      %1581 = vmatmul.mubr.bf16.gmra.mxu0 %v944
      %v1582 = vpop.f32.mrf.mxu0
      %v1583 = vadd.f32 %v1512, %v1582
      %v1584 = vpop.f32.mrf.mxu0
      %v1585 = vpop.f32.mrf.mxu0
      %v1586 = vadd.f32 %v1512, %v1585
      %v1587 = vpop.f32.mrf.mxu0
      %1588 = vmatprep.mubr.bf16.mxu0 0
      %1589 = vmatmul.mubr.bf16.gmra.mxu0 %v947
      %v1590 = vpop.f32.mrf.mxu0
      %v1591 = vadd.f32 %v1512, %v1590
      %v1592 = vpop.f32.mrf.mxu0
      %v1593 = vpop.f32.mrf.mxu0
      %v1594 = vadd.f32 %v1512, %v1593
      %v1595 = vpop.f32.mrf.mxu0
      %1596 = vmatprep.mubr.bf16.mxu0 0
      %1597 = vmatmul.mubr.bf16.gmra.mxu0 %v950
      %v1598 = vpop.f32.mrf.mxu0
      %v1599 = vadd.f32 %v1512, %v1598
      %v1600 = vpop.f32.mrf.mxu0
      %v1601 = vpop.f32.mrf.mxu0
      %v1602 = vadd.f32 %v1512, %v1601
      %v1603 = vpop.f32.mrf.mxu0
      %1604 = vmatprep.mubr.bf16.mxu0 0
      %1605 = vmatmul.mubr.bf16.gmra.mxu0 %v953
      %v1606 = vpop.f32.mrf.mxu0
      %v1607 = vadd.f32 %v1512, %v1606
      %v1608 = vpop.f32.mrf.mxu0
      %v1609 = vpop.f32.mrf.mxu0
      %v1610 = vadd.f32 %v1512, %v1609
      %v1611 = vpop.f32.mrf.mxu0
      %1612 = vmatprep.mubr.bf16.mxu0 0
      %1613 = vmatmul.mubr.bf16.gmra.mxu0 %v956
      %v1614 = vpop.f32.mrf.mxu0
      %v1615 = vadd.f32 %v1512, %v1614
      %v1616 = vpop.f32.mrf.mxu0
      %v1617 = vpop.f32.mrf.mxu0
      %v1618 = vadd.f32 %v1512, %v1617
      %v1619 = vpop.f32.mrf.mxu0
      %1620 = vmatprep.mubr.bf16.mxu0 0
      %1621 = vmatmul.mubr.bf16.gmra.mxu0 %v959
      %v1622 = vpop.f32.mrf.mxu0
      %v1623 = vadd.f32 %v1512, %v1622
      %v1624 = vpop.f32.mrf.mxu0
      %v1625 = vpop.f32.mrf.mxu0
      %v1626 = vadd.f32 %v1512, %v1625
      %v1627 = vpop.f32.mrf.mxu0
      %1628 = vmatprep.mubr.bf16.mxu0 0
      %1629 = vmatmul.mubr.bf16.gmra.mxu0 %v962
      %v1630 = vpop.f32.mrf.mxu0
      %v1631 = vadd.f32 %v1512, %v1630
      %v1632 = vpop.f32.mrf.mxu0
      %v1633 = vpop.f32.mrf.mxu0
      %v1634 = vadd.f32 %v1512, %v1633
      %v1635 = vpop.f32.mrf.mxu0
      %1636 = vmatprep.mubr.bf16.mxu0 0
      %1637 = vmatmul.mubr.bf16.gmra.mxu0 %v965
      %v1638 = vpop.f32.mrf.mxu0
      %v1639 = vadd.f32 %v1512, %v1638
      %v1640 = vpop.f32.mrf.mxu0
      %v1641 = vpop.f32.mrf.mxu0
      %v1642 = vadd.f32 %v1512, %v1641
      %v1643 = vpop.f32.mrf.mxu0
      %1644 = vmatprep.mubr.bf16.mxu0 0
      %1645 = vmatmul.mubr.bf16.gmra.mxu0 %v968
      %v1646 = vpop.f32.mrf.mxu0
      %v1647 = vadd.f32 %v1512, %v1646
      %v1648 = vpop.f32.mrf.mxu0
      %v1649 = vpop.f32.mrf.mxu0
      %v1650 = vadd.f32 %v1512, %v1649
      %v1651 = vpop.f32.mrf.mxu0
      %1652 = vmatprep.mubr.bf16.mxu0 0
      %1653 = vmatmul.mubr.bf16.gmra.mxu0 %v971
      %v1654 = vpop.f32.mrf.mxu0
      %v1655 = vadd.f32 %v1512, %v1654
      %v1656 = vpop.f32.mrf.mxu0
      %v1657 = vpop.f32.mrf.mxu0
      %v1658 = vadd.f32 %v1512, %v1657
      %v1659 = vpop.f32.mrf.mxu0
      %1660 = vmatprep.mubr.bf16.mxu0 0
      %1661 = vmatmul.mubr.bf16.gmra.mxu0 %v974
      %v1662 = vpop.f32.mrf.mxu0
      %v1663 = vadd.f32 %v1512, %v1662
      %v1664 = vpop.f32.mrf.mxu0
      %v1665 = vpop.f32.mrf.mxu0
      %v1666 = vadd.f32 %v1512, %v1665
      %v1667 = vpop.f32.mrf.mxu0
      %1668 = vmatprep.mubr.bf16.mxu0 0
      %1669 = vmatmul.mubr.bf16.gmra.mxu0 %v977
      %v1670 = vpop.f32.mrf.mxu0
      %v1671 = vadd.f32 %v1512, %v1670
      %v1672 = vpop.f32.mrf.mxu0
      %v1673 = vpop.f32.mrf.mxu0
      %v1674 = vadd.f32 %v1512, %v1673
      %v1675 = vpop.f32.mrf.mxu0
      %1676 = vmatprep.mubr.bf16.mxu0 0
      %1677 = vmatmul.mubr.bf16.gmra.mxu0 %v980
      %v1678 = vpop.f32.mrf.mxu0
      %v1679 = vadd.f32 %v1512, %v1678
      %v1680 = vpop.f32.mrf.mxu0
      %v1681 = vpop.f32.mrf.mxu0
      %v1682 = vadd.f32 %v1512, %v1681
      %v1683 = vpop.f32.mrf.mxu0
      %1684 = vmatprep.mubr.bf16.mxu0 0
      %1685 = vmatmul.mubr.bf16.gmra.mxu0 %v983
      %v1686 = vpop.f32.mrf.mxu0
      %v1687 = vadd.f32 %v1512, %v1686
      %v1688 = vpop.f32.mrf.mxu0
      %v1689 = vpop.f32.mrf.mxu0
      %v1690 = vadd.f32 %v1512, %v1689
      %v1691 = vpop.f32.mrf.mxu0
      %1692 = vdwg.mxu0
      %v1693 = vmul.f32 %v474, %v1567
      %v1694 = vmul.f32 %v475, %v1570
      %v1695 = vmul.f32 %v476, %v1575
      %v1696 = vmul.f32 %v477, %v1578
      %v1697 = vmul.f32 %v478, %v1583
      %v1698 = vmul.f32 %v479, %v1586
      %v1699 = vmul.f32 %v480, %v1591
      %v1700 = vmul.f32 %v481, %v1594
      %v1701 = vmul.f32 %v482, %v1599
      %v1702 = vmul.f32 %v483, %v1602
      %v1703 = vmul.f32 %v484, %v1607
      %v1704 = vmul.f32 %v485, %v1610
      %v1705 = vmul.f32 %v486, %v1615
      %v1706 = vmul.f32 %v487, %v1618
      %v1707 = vmul.f32 %v488, %v1623
      %v1708 = vmul.f32 %v489, %v1626
      %v1709 = vmul.f32 %v490, %v1631
      %v1710 = vmul.f32 %v491, %v1634
      %v1711 = vmul.f32 %v492, %v1639
      %v1712 = vmul.f32 %v493, %v1642
      %v1713 = vmul.f32 %v494, %v1647
      %v1714 = vmul.f32 %v495, %v1650
      %v1715 = vmul.f32 %v496, %v1655
      %v1716 = vmul.f32 %v497, %v1658
      %v1717 = vmul.f32 %v498, %v1663
      %v1718 = vmul.f32 %v499, %v1666
      %v1719 = vmul.f32 %v500, %v1671
      %v1720 = vmul.f32 %v501, %v1674
      %v1721 = vmul.f32 %v502, %v1679
      %v1722 = vmul.f32 %v503, %v1682
      %v1723 = vmul.f32 %v504, %v1687
      %v1724 = vmul.f32 %v505, %v1690
      %v1725 = vadd.f32 %v1693, %v474
      %v1726 = vadd.f32 %v1694, %v475
      %v1727 = vadd.f32 %v1695, %v476
      %v1728 = vadd.f32 %v1696, %v477
      %v1729 = vadd.f32 %v1697, %v478
      %v1730 = vadd.f32 %v1698, %v479
      %v1731 = vadd.f32 %v1699, %v480
      %v1732 = vadd.f32 %v1700, %v481
      %v1733 = vadd.f32 %v1701, %v482
      %v1734 = vadd.f32 %v1702, %v483
      %v1735 = vadd.f32 %v1703, %v484
      %v1736 = vadd.f32 %v1704, %v485
      %v1737 = vadd.f32 %v1705, %v486
      %v1738 = vadd.f32 %v1706, %v487
      %v1739 = vadd.f32 %v1707, %v488
      %v1740 = vadd.f32 %v1708, %v489
      %v1741 = vadd.f32 %v1709, %v490
      %v1742 = vadd.f32 %v1710, %v491
      %v1743 = vadd.f32 %v1711, %v492
      %v1744 = vadd.f32 %v1712, %v493
      %v1745 = vadd.f32 %v1713, %v494
      %v1746 = vadd.f32 %v1714, %v495
      %v1747 = vadd.f32 %v1715, %v496
      %v1748 = vadd.f32 %v1716, %v497
      %v1749 = vadd.f32 %v1717, %v498
      %v1750 = vadd.f32 %v1718, %v499
      %v1751 = vadd.f32 %v1719, %v500
      %v1752 = vadd.f32 %v1720, %v501
      %v1753 = vadd.f32 %v1721, %v502
      %v1754 = vadd.f32 %v1722, %v503
      %v1755 = vadd.f32 %v1723, %v504
      %v1756 = vadd.f32 %v1724, %v505
      %v1757 = vpack.c.bf16 %v1726, %v1725
      %v1758 = vpack.c.bf16 %v1728, %v1727
      %v1759 = vpack.c.bf16 %v1730, %v1729
      %v1760 = vpack.c.bf16 %v1732, %v1731
      %v1761 = vpack.c.bf16 %v1734, %v1733
      %v1762 = vpack.c.bf16 %v1736, %v1735
      %v1763 = vpack.c.bf16 %v1738, %v1737
      %v1764 = vpack.c.bf16 %v1740, %v1739
      %v1765 = vpack.c.bf16 %v1742, %v1741
      %v1766 = vpack.c.bf16 %v1744, %v1743
      %v1767 = vpack.c.bf16 %v1746, %v1745
      %v1768 = vpack.c.bf16 %v1748, %v1747
      %v1769 = vpack.c.bf16 %v1750, %v1749
      %v1770 = vpack.c.bf16 %v1752, %v1751
      %v1771 = vpack.c.bf16 %v1754, %v1753
      %v1772 = vpack.c.bf16 %v1756, %v1755
      %s1773 = scalar_lea.vmem %s2, 20
      %v1774 = vld [vmem:[%s1773] sm:$0xf]
      %v1775 = vld [vmem:[%s1773 + $0x4] sm:$0xf]
      %v1776 = vld [vmem:[%s1773 + $0x8] sm:$0xf]
      %v1777 = vld [vmem:[%s1773 + $0xc] sm:$0xf]
      %v1778 = vld [vmem:[%s1773 + $0x10] sm:$0xf]
      %s1779 = scalar_lea.vmem %s3, 1
      %v1780 = vld [vmem:[%s1779] sm:$0x1]
      %v1782 = vlaneseq
      %v1783 = vshrl.u32 %v1782, 7
      %v1784 = vsub.s32 0, %v1783
      %v1785 = vrot.slane %v1780, %v1784
      %v1792 = vunpack.c.l.b16 %v1774
      %v1793 = vunpack.c.l.b16 %v1775
      %v1794 = vunpack.c.l.b16 %v1776
      %v1795 = vunpack.c.l.b16 %v1777
      %v1796 = vunpack.c.l.b16 %v1778
      %v1797 = vpack.c.b16 %v1793, %v1792
      %v1798 = vpack.c.b16 %v1795, %v1794
      %v1799 = vpack.c.b16 %v1796, %v1796
      %v1803 = vsel %vm936, %v1757, 0
      %v1806 = vsel %vm936, %v1758, 0
      %v1809 = vsel %vm936, %v1759, 0
      %v1812 = vsel %vm936, %v1760, 0
      %v1815 = vsel %vm936, %v1761, 0
      %v1818 = vsel %vm936, %v1762, 0
      %v1821 = vsel %vm936, %v1763, 0
      %v1824 = vsel %vm936, %v1764, 0
      %v1827 = vsel %vm936, %v1765, 0
      %v1830 = vsel %vm936, %v1766, 0
      %v1833 = vsel %vm936, %v1767, 0
      %v1836 = vsel %vm936, %v1768, 0
      %v1839 = vsel %vm936, %v1769, 0
      %v1842 = vsel %vm936, %v1770, 0
      %v1845 = vsel %vm936, %v1771, 0
      %v1848 = vsel %vm936, %v1772, 0
      %v1851 = vsel %vm985, %v1799, 0
      %1853 = vmatprep.subr.bf16.mxu0 0
      %1854 = vmatpush1.bf16.msra.mxu0 0
      %1855 = vmatprep.subr.bf16.mxu0 0
      %1856 = vmatpush1.bf16.msra.mxu0 0
      %1857 = vmatprep.subr.bf16.mxu0 0
      %1858 = vmatpush1.bf16.msra.mxu0 0
      %1859 = vmatprep.subr.bf16.mxu0 0
      %1860 = vmatpush1.bf16.msra.mxu0 0
      %1861 = vmatprep.subr.bf16.mxu0 0
      %1862 = vmatpush1.bf16.msra.mxu0 0
      %1863 = vmatprep.subr.bf16.mxu0 0
      %1864 = vmatpush1.bf16.msra.mxu0 %v1851
      %1865 = vmatprep.subr.bf16.mxu0 0
      %1866 = vmatpush1.bf16.msra.mxu0 %v1798
      %1867 = vmatprep.subr.bf16.mxu0 0
      %1868 = vmatpush1.bf16.msra.mxu0 %v1797
      %1869 = vmatprep.subr.bf16.mxu0 0
      %1870 = vmatpush2.bf16.msra.mxu0 0
      %1871 = vmatprep.subr.bf16.mxu0 0
      %1872 = vmatpush2.bf16.msra.mxu0 0
      %1873 = vmatprep.subr.bf16.mxu0 0
      %1874 = vmatpush2.bf16.msra.mxu0 0
      %1875 = vmatprep.subr.bf16.mxu0 0
      %1876 = vmatpush2.bf16.msra.mxu0 0
      %1877 = vmatprep.subr.bf16.mxu0 0
      %1878 = vmatpush2.bf16.msra.mxu0 0
      %1879 = vmatprep.subr.bf16.mxu0 0
      %1880 = vmatpush2.bf16.msra.mxu0 0
      %1881 = vmatprep.subr.bf16.mxu0 0
      %1882 = vmatpush2.bf16.msra.mxu0 0
      %1883 = vmatprep.subr.bf16.mxu0 0
      %1884 = vmatpush2.bf16.msra.mxu0 0
      %1885 = vmatprep.mubr.bf16.mxu0 0
      %1886 = vmatmul.mubr.bf16.gmra.mxu0 %v1803
      %v1887 = vpop.f32.mrf.mxu0
      %v1888 = vadd.f32 %v1785, %v1887
      %v1889 = vpop.f32.mrf.mxu0
      %v1890 = vpop.f32.mrf.mxu0
      %v1891 = vadd.f32 %v1785, %v1890
      %v1892 = vpop.f32.mrf.mxu0
      %1893 = vmatprep.mubr.bf16.mxu0 0
      %1894 = vmatmul.mubr.bf16.gmra.mxu0 %v1806
      %v1895 = vpop.f32.mrf.mxu0
      %v1896 = vadd.f32 %v1785, %v1895
      %v1897 = vpop.f32.mrf.mxu0
      %v1898 = vpop.f32.mrf.mxu0
      %v1899 = vadd.f32 %v1785, %v1898
      %v1900 = vpop.f32.mrf.mxu0
      %1901 = vmatprep.mubr.bf16.mxu0 0
      %1902 = vmatmul.mubr.bf16.gmra.mxu0 %v1809
      %v1903 = vpop.f32.mrf.mxu0
      %v1904 = vadd.f32 %v1785, %v1903
      %v1905 = vpop.f32.mrf.mxu0
      %v1906 = vpop.f32.mrf.mxu0
      %v1907 = vadd.f32 %v1785, %v1906
      %v1908 = vpop.f32.mrf.mxu0
      %1909 = vmatprep.mubr.bf16.mxu0 0
      %1910 = vmatmul.mubr.bf16.gmra.mxu0 %v1812
      %v1911 = vpop.f32.mrf.mxu0
      %v1912 = vadd.f32 %v1785, %v1911
      %v1913 = vpop.f32.mrf.mxu0
      %v1914 = vpop.f32.mrf.mxu0
      %v1915 = vadd.f32 %v1785, %v1914
      %v1916 = vpop.f32.mrf.mxu0
      %1917 = vmatprep.mubr.bf16.mxu0 0
      %1918 = vmatmul.mubr.bf16.gmra.mxu0 %v1815
      %v1919 = vpop.f32.mrf.mxu0
      %v1920 = vadd.f32 %v1785, %v1919
      %v1921 = vpop.f32.mrf.mxu0
      %v1922 = vpop.f32.mrf.mxu0
      %v1923 = vadd.f32 %v1785, %v1922
      %v1924 = vpop.f32.mrf.mxu0
      %1925 = vmatprep.mubr.bf16.mxu0 0
      %1926 = vmatmul.mubr.bf16.gmra.mxu0 %v1818
      %v1927 = vpop.f32.mrf.mxu0
      %v1928 = vadd.f32 %v1785, %v1927
      %v1929 = vpop.f32.mrf.mxu0
      %v1930 = vpop.f32.mrf.mxu0
      %v1931 = vadd.f32 %v1785, %v1930
      %v1932 = vpop.f32.mrf.mxu0
      %1933 = vmatprep.mubr.bf16.mxu0 0
      %1934 = vmatmul.mubr.bf16.gmra.mxu0 %v1821
      %v1935 = vpop.f32.mrf.mxu0
      %v1936 = vadd.f32 %v1785, %v1935
      %v1937 = vpop.f32.mrf.mxu0
      %v1938 = vpop.f32.mrf.mxu0
      %v1939 = vadd.f32 %v1785, %v1938
      %v1940 = vpop.f32.mrf.mxu0
      %1941 = vmatprep.mubr.bf16.mxu0 0
      %1942 = vmatmul.mubr.bf16.gmra.mxu0 %v1824
      %v1943 = vpop.f32.mrf.mxu0
      %v1944 = vadd.f32 %v1785, %v1943
      %v1945 = vpop.f32.mrf.mxu0
      %v1946 = vpop.f32.mrf.mxu0
      %v1947 = vadd.f32 %v1785, %v1946
      %v1948 = vpop.f32.mrf.mxu0
      %1949 = vmatprep.mubr.bf16.mxu0 0
      %1950 = vmatmul.mubr.bf16.gmra.mxu0 %v1827
      %v1951 = vpop.f32.mrf.mxu0
      %v1952 = vadd.f32 %v1785, %v1951
      %v1953 = vpop.f32.mrf.mxu0
      %v1954 = vpop.f32.mrf.mxu0
      %v1955 = vadd.f32 %v1785, %v1954
      %v1956 = vpop.f32.mrf.mxu0
      %1957 = vmatprep.mubr.bf16.mxu0 0
      %1958 = vmatmul.mubr.bf16.gmra.mxu0 %v1830
      %v1959 = vpop.f32.mrf.mxu0
      %v1960 = vadd.f32 %v1785, %v1959
      %v1961 = vpop.f32.mrf.mxu0
      %v1962 = vpop.f32.mrf.mxu0
      %v1963 = vadd.f32 %v1785, %v1962
      %v1964 = vpop.f32.mrf.mxu0
      %1965 = vmatprep.mubr.bf16.mxu0 0
      %1966 = vmatmul.mubr.bf16.gmra.mxu0 %v1833
      %v1967 = vpop.f32.mrf.mxu0
      %v1968 = vadd.f32 %v1785, %v1967
      %v1969 = vpop.f32.mrf.mxu0
      %v1970 = vpop.f32.mrf.mxu0
      %v1971 = vadd.f32 %v1785, %v1970
      %v1972 = vpop.f32.mrf.mxu0
      %1973 = vmatprep.mubr.bf16.mxu0 0
      %1974 = vmatmul.mubr.bf16.gmra.mxu0 %v1836
      %v1975 = vpop.f32.mrf.mxu0
      %v1976 = vadd.f32 %v1785, %v1975
      %v1977 = vpop.f32.mrf.mxu0
      %v1978 = vpop.f32.mrf.mxu0
      %v1979 = vadd.f32 %v1785, %v1978
      %v1980 = vpop.f32.mrf.mxu0
      %1981 = vmatprep.mubr.bf16.mxu0 0
      %1982 = vmatmul.mubr.bf16.gmra.mxu0 %v1839
      %v1983 = vpop.f32.mrf.mxu0
      %v1984 = vadd.f32 %v1785, %v1983
      %v1985 = vpop.f32.mrf.mxu0
      %v1986 = vpop.f32.mrf.mxu0
      %v1987 = vadd.f32 %v1785, %v1986
      %v1988 = vpop.f32.mrf.mxu0
      %1989 = vmatprep.mubr.bf16.mxu0 0
      %1990 = vmatmul.mubr.bf16.gmra.mxu0 %v1842
      %v1991 = vpop.f32.mrf.mxu0
      %v1992 = vadd.f32 %v1785, %v1991
      %v1993 = vpop.f32.mrf.mxu0
      %v1994 = vpop.f32.mrf.mxu0
      %v1995 = vadd.f32 %v1785, %v1994
      %v1996 = vpop.f32.mrf.mxu0
      %1997 = vmatprep.mubr.bf16.mxu0 0
      %1998 = vmatmul.mubr.bf16.gmra.mxu0 %v1845
      %v1999 = vpop.f32.mrf.mxu0
      %v2000 = vadd.f32 %v1785, %v1999
      %v2001 = vpop.f32.mrf.mxu0
      %v2002 = vpop.f32.mrf.mxu0
      %v2003 = vadd.f32 %v1785, %v2002
      %v2004 = vpop.f32.mrf.mxu0
      %2005 = vmatprep.mubr.bf16.mxu0 0
      %2006 = vmatmul.mubr.bf16.gmra.mxu0 %v1848
      %v2007 = vpop.f32.mrf.mxu0
      %v2008 = vadd.f32 %v1785, %v2007
      %v2009 = vpop.f32.mrf.mxu0
      %v2010 = vpop.f32.mrf.mxu0
      %v2011 = vadd.f32 %v1785, %v2010
      %v2012 = vpop.f32.mrf.mxu0
      %2013 = vdwg.mxu0
      %v2014 = vmul.f32 %v474, %v1888
      %v2015 = vmul.f32 %v475, %v1891
      %v2016 = vmul.f32 %v476, %v1896
      %v2017 = vmul.f32 %v477, %v1899
      %v2018 = vmul.f32 %v478, %v1904
      %v2019 = vmul.f32 %v479, %v1907
      %v2020 = vmul.f32 %v480, %v1912
      %v2021 = vmul.f32 %v481, %v1915
      %v2022 = vmul.f32 %v482, %v1920
      %v2023 = vmul.f32 %v483, %v1923
      %v2024 = vmul.f32 %v484, %v1928
      %v2025 = vmul.f32 %v485, %v1931
      %v2026 = vmul.f32 %v486, %v1936
      %v2027 = vmul.f32 %v487, %v1939
      %v2028 = vmul.f32 %v488, %v1944
      %v2029 = vmul.f32 %v489, %v1947
      %v2030 = vmul.f32 %v490, %v1952
      %v2031 = vmul.f32 %v491, %v1955
      %v2032 = vmul.f32 %v492, %v1960
      %v2033 = vmul.f32 %v493, %v1963
      %v2034 = vmul.f32 %v494, %v1968
      %v2035 = vmul.f32 %v495, %v1971
      %v2036 = vmul.f32 %v496, %v1976
      %v2037 = vmul.f32 %v497, %v1979
      %v2038 = vmul.f32 %v498, %v1984
      %v2039 = vmul.f32 %v499, %v1987
      %v2040 = vmul.f32 %v500, %v1992
      %v2041 = vmul.f32 %v501, %v1995
      %v2042 = vmul.f32 %v502, %v2000
      %v2043 = vmul.f32 %v503, %v2003
      %v2044 = vmul.f32 %v504, %v2008
      %v2045 = vmul.f32 %v505, %v2011
      %v2046 = vadd.f32 %v2014, %v1725
      %v2047 = vadd.f32 %v2015, %v1726
      %v2048 = vadd.f32 %v2016, %v1727
      %v2049 = vadd.f32 %v2017, %v1728
      %v2050 = vadd.f32 %v2018, %v1729
      %v2051 = vadd.f32 %v2019, %v1730
      %v2052 = vadd.f32 %v2020, %v1731
      %v2053 = vadd.f32 %v2021, %v1732
      %v2054 = vadd.f32 %v2022, %v1733
      %v2055 = vadd.f32 %v2023, %v1734
      %v2056 = vadd.f32 %v2024, %v1735
      %v2057 = vadd.f32 %v2025, %v1736
      %v2058 = vadd.f32 %v2026, %v1737
      %v2059 = vadd.f32 %v2027, %v1738
      %v2060 = vadd.f32 %v2028, %v1739
      %v2061 = vadd.f32 %v2029, %v1740
      %v2062 = vadd.f32 %v2030, %v1741
      %v2063 = vadd.f32 %v2031, %v1742
      %v2064 = vadd.f32 %v2032, %v1743
      %v2065 = vadd.f32 %v2033, %v1744
      %v2066 = vadd.f32 %v2034, %v1745
      %v2067 = vadd.f32 %v2035, %v1746
      %v2068 = vadd.f32 %v2036, %v1747
      %v2069 = vadd.f32 %v2037, %v1748
      %v2070 = vadd.f32 %v2038, %v1749
      %v2071 = vadd.f32 %v2039, %v1750
      %v2072 = vadd.f32 %v2040, %v1751
      %v2073 = vadd.f32 %v2041, %v1752
      %v2074 = vadd.f32 %v2042, %v1753
      %v2075 = vadd.f32 %v2043, %v1754
      %v2076 = vadd.f32 %v2044, %v1755
      %v2077 = vadd.f32 %v2045, %v1756
      %v2078 = vpack.c.bf16 %v2047, %v2046
      %v2079 = vpack.c.bf16 %v2049, %v2048
      %v2080 = vpack.c.bf16 %v2051, %v2050
      %v2081 = vpack.c.bf16 %v2053, %v2052
      %v2082 = vpack.c.bf16 %v2055, %v2054
      %v2083 = vpack.c.bf16 %v2057, %v2056
      %v2084 = vpack.c.bf16 %v2059, %v2058
      %v2085 = vpack.c.bf16 %v2061, %v2060
      %v2086 = vpack.c.bf16 %v2063, %v2062
      %v2087 = vpack.c.bf16 %v2065, %v2064
      %v2088 = vpack.c.bf16 %v2067, %v2066
      %v2089 = vpack.c.bf16 %v2069, %v2068
      %v2090 = vpack.c.bf16 %v2071, %v2070
      %v2091 = vpack.c.bf16 %v2073, %v2072
      %v2092 = vpack.c.bf16 %v2075, %v2074
      %v2093 = vpack.c.bf16 %v2077, %v2076
      %s2094 = scalar_lea.vmem %s2, 40
      %v2095 = vld [vmem:[%s2094] sm:$0xf]
      %v2096 = vld [vmem:[%s2094 + $0x4] sm:$0xf]
      %v2097 = vld [vmem:[%s2094 + $0x8] sm:$0xf]
      %v2098 = vld [vmem:[%s2094 + $0xc] sm:$0xf]
      %v2099 = vld [vmem:[%s2094 + $0x10] sm:$0xf]
      %s2100 = scalar_lea.vmem %s3, 2
      %v2101 = vld [vmem:[%s2100] sm:$0x1]
      %v2103 = vlaneseq
      %v2104 = vshrl.u32 %v2103, 7
      %v2105 = vsub.s32 0, %v2104
      %v2106 = vrot.slane %v2101, %v2105
      %v2113 = vunpack.c.l.b16 %v2095
      %v2114 = vunpack.c.l.b16 %v2096
      %v2115 = vunpack.c.l.b16 %v2097
      %v2116 = vunpack.c.l.b16 %v2098
      %v2117 = vunpack.c.l.b16 %v2099
      %v2118 = vpack.c.b16 %v2114, %v2113
      %v2119 = vpack.c.b16 %v2116, %v2115
      %v2120 = vpack.c.b16 %v2117, %v2117
      %v2124 = vsel %vm936, %v2078, 0
      %v2127 = vsel %vm936, %v2079, 0
      %v2130 = vsel %vm936, %v2080, 0
      %v2133 = vsel %vm936, %v2081, 0
      %v2136 = vsel %vm936, %v2082, 0
      %v2139 = vsel %vm936, %v2083, 0
      %v2142 = vsel %vm936, %v2084, 0
      %v2145 = vsel %vm936, %v2085, 0
      %v2148 = vsel %vm936, %v2086, 0
      %v2151 = vsel %vm936, %v2087, 0
      %v2154 = vsel %vm936, %v2088, 0
      %v2157 = vsel %vm936, %v2089, 0
      %v2160 = vsel %vm936, %v2090, 0
      %v2163 = vsel %vm936, %v2091, 0
      %v2166 = vsel %vm936, %v2092, 0
      %v2169 = vsel %vm936, %v2093, 0
      %v2172 = vsel %vm985, %v2120, 0
      %2174 = vmatprep.subr.bf16.mxu0 0
      %2175 = vmatpush1.bf16.msra.mxu0 0
      %2176 = vmatprep.subr.bf16.mxu0 0
      %2177 = vmatpush1.bf16.msra.mxu0 0
      %2178 = vmatprep.subr.bf16.mxu0 0
      %2179 = vmatpush1.bf16.msra.mxu0 0
      %2180 = vmatprep.subr.bf16.mxu0 0
      %2181 = vmatpush1.bf16.msra.mxu0 0
      %2182 = vmatprep.subr.bf16.mxu0 0
      %2183 = vmatpush1.bf16.msra.mxu0 0
      %2184 = vmatprep.subr.bf16.mxu0 0
      %2185 = vmatpush1.bf16.msra.mxu0 %v2172
      %2186 = vmatprep.subr.bf16.mxu0 0
      %2187 = vmatpush1.bf16.msra.mxu0 %v2119
      %2188 = vmatprep.subr.bf16.mxu0 0
      %2189 = vmatpush1.bf16.msra.mxu0 %v2118
      %2190 = vmatprep.subr.bf16.mxu0 0
      %2191 = vmatpush2.bf16.msra.mxu0 0
      %2192 = vmatprep.subr.bf16.mxu0 0
      %2193 = vmatpush2.bf16.msra.mxu0 0
      %2194 = vmatprep.subr.bf16.mxu0 0
      %2195 = vmatpush2.bf16.msra.mxu0 0
      %2196 = vmatprep.subr.bf16.mxu0 0
      %2197 = vmatpush2.bf16.msra.mxu0 0
      %2198 = vmatprep.subr.bf16.mxu0 0
      %2199 = vmatpush2.bf16.msra.mxu0 0
      %2200 = vmatprep.subr.bf16.mxu0 0
      %2201 = vmatpush2.bf16.msra.mxu0 0
      %2202 = vmatprep.subr.bf16.mxu0 0
      %2203 = vmatpush2.bf16.msra.mxu0 0
      %2204 = vmatprep.subr.bf16.mxu0 0
      %2205 = vmatpush2.bf16.msra.mxu0 0
      %2206 = vmatprep.mubr.bf16.mxu0 0
      %2207 = vmatmul.mubr.bf16.gmra.mxu0 %v2124
      %v2208 = vpop.f32.mrf.mxu0
      %v2209 = vadd.f32 %v2106, %v2208
      %v2210 = vpop.f32.mrf.mxu0
      %v2211 = vpop.f32.mrf.mxu0
      %v2212 = vadd.f32 %v2106, %v2211
      %v2213 = vpop.f32.mrf.mxu0
      %2214 = vmatprep.mubr.bf16.mxu0 0
      %2215 = vmatmul.mubr.bf16.gmra.mxu0 %v2127
      %v2216 = vpop.f32.mrf.mxu0
      %v2217 = vadd.f32 %v2106, %v2216
      %v2218 = vpop.f32.mrf.mxu0
      %v2219 = vpop.f32.mrf.mxu0
      %v2220 = vadd.f32 %v2106, %v2219
      %v2221 = vpop.f32.mrf.mxu0
      %2222 = vmatprep.mubr.bf16.mxu0 0
      %2223 = vmatmul.mubr.bf16.gmra.mxu0 %v2130
      %v2224 = vpop.f32.mrf.mxu0
      %v2225 = vadd.f32 %v2106, %v2224
      %v2226 = vpop.f32.mrf.mxu0
      %v2227 = vpop.f32.mrf.mxu0
      %v2228 = vadd.f32 %v2106, %v2227
      %v2229 = vpop.f32.mrf.mxu0
      %2230 = vmatprep.mubr.bf16.mxu0 0
      %2231 = vmatmul.mubr.bf16.gmra.mxu0 %v2133
      %v2232 = vpop.f32.mrf.mxu0
      %v2233 = vadd.f32 %v2106, %v2232
      %v2234 = vpop.f32.mrf.mxu0
      %v2235 = vpop.f32.mrf.mxu0
      %v2236 = vadd.f32 %v2106, %v2235
      %v2237 = vpop.f32.mrf.mxu0
      %2238 = vmatprep.mubr.bf16.mxu0 0
      %2239 = vmatmul.mubr.bf16.gmra.mxu0 %v2136
      %v2240 = vpop.f32.mrf.mxu0
      %v2241 = vadd.f32 %v2106, %v2240
      %v2242 = vpop.f32.mrf.mxu0
      %v2243 = vpop.f32.mrf.mxu0
      %v2244 = vadd.f32 %v2106, %v2243
      %v2245 = vpop.f32.mrf.mxu0
      %2246 = vmatprep.mubr.bf16.mxu0 0
      %2247 = vmatmul.mubr.bf16.gmra.mxu0 %v2139
      %v2248 = vpop.f32.mrf.mxu0
      %v2249 = vadd.f32 %v2106, %v2248
      %v2250 = vpop.f32.mrf.mxu0
      %v2251 = vpop.f32.mrf.mxu0
      %v2252 = vadd.f32 %v2106, %v2251
      %v2253 = vpop.f32.mrf.mxu0
      %2254 = vmatprep.mubr.bf16.mxu0 0
      %2255 = vmatmul.mubr.bf16.gmra.mxu0 %v2142
      %v2256 = vpop.f32.mrf.mxu0
      %v2257 = vadd.f32 %v2106, %v2256
      %v2258 = vpop.f32.mrf.mxu0
      %v2259 = vpop.f32.mrf.mxu0
      %v2260 = vadd.f32 %v2106, %v2259
      %v2261 = vpop.f32.mrf.mxu0
      %2262 = vmatprep.mubr.bf16.mxu0 0
      %2263 = vmatmul.mubr.bf16.gmra.mxu0 %v2145
      %v2264 = vpop.f32.mrf.mxu0
      %v2265 = vadd.f32 %v2106, %v2264
      %v2266 = vpop.f32.mrf.mxu0
      %v2267 = vpop.f32.mrf.mxu0
      %v2268 = vadd.f32 %v2106, %v2267
      %v2269 = vpop.f32.mrf.mxu0
      %2270 = vmatprep.mubr.bf16.mxu0 0
      %2271 = vmatmul.mubr.bf16.gmra.mxu0 %v2148
      %v2272 = vpop.f32.mrf.mxu0
      %v2273 = vadd.f32 %v2106, %v2272
      %v2274 = vpop.f32.mrf.mxu0
      %v2275 = vpop.f32.mrf.mxu0
      %v2276 = vadd.f32 %v2106, %v2275
      %v2277 = vpop.f32.mrf.mxu0
      %2278 = vmatprep.mubr.bf16.mxu0 0
      %2279 = vmatmul.mubr.bf16.gmra.mxu0 %v2151
      %v2280 = vpop.f32.mrf.mxu0
      %v2281 = vadd.f32 %v2106, %v2280
      %v2282 = vpop.f32.mrf.mxu0
      %v2283 = vpop.f32.mrf.mxu0
      %v2284 = vadd.f32 %v2106, %v2283
      %v2285 = vpop.f32.mrf.mxu0
      %2286 = vmatprep.mubr.bf16.mxu0 0
      %2287 = vmatmul.mubr.bf16.gmra.mxu0 %v2154
      %v2288 = vpop.f32.mrf.mxu0
      %v2289 = vadd.f32 %v2106, %v2288
      %v2290 = vpop.f32.mrf.mxu0
      %v2291 = vpop.f32.mrf.mxu0
      %v2292 = vadd.f32 %v2106, %v2291
      %v2293 = vpop.f32.mrf.mxu0
      %2294 = vmatprep.mubr.bf16.mxu0 0
      %2295 = vmatmul.mubr.bf16.gmra.mxu0 %v2157
      %v2296 = vpop.f32.mrf.mxu0
      %v2297 = vadd.f32 %v2106, %v2296
      %v2298 = vpop.f32.mrf.mxu0
      %v2299 = vpop.f32.mrf.mxu0
      %v2300 = vadd.f32 %v2106, %v2299
      %v2301 = vpop.f32.mrf.mxu0
      %2302 = vmatprep.mubr.bf16.mxu0 0
      %2303 = vmatmul.mubr.bf16.gmra.mxu0 %v2160
      %v2304 = vpop.f32.mrf.mxu0
      %v2305 = vadd.f32 %v2106, %v2304
      %v2306 = vpop.f32.mrf.mxu0
      %v2307 = vpop.f32.mrf.mxu0
      %v2308 = vadd.f32 %v2106, %v2307
      %v2309 = vpop.f32.mrf.mxu0
      %2310 = vmatprep.mubr.bf16.mxu0 0
      %2311 = vmatmul.mubr.bf16.gmra.mxu0 %v2163
      %v2312 = vpop.f32.mrf.mxu0
      %v2313 = vadd.f32 %v2106, %v2312
      %v2314 = vpop.f32.mrf.mxu0
      %v2315 = vpop.f32.mrf.mxu0
      %v2316 = vadd.f32 %v2106, %v2315
      %v2317 = vpop.f32.mrf.mxu0
      %2318 = vmatprep.mubr.bf16.mxu0 0
      %2319 = vmatmul.mubr.bf16.gmra.mxu0 %v2166
      %v2320 = vpop.f32.mrf.mxu0
      %v2321 = vadd.f32 %v2106, %v2320
      %v2322 = vpop.f32.mrf.mxu0
      %v2323 = vpop.f32.mrf.mxu0
      %v2324 = vadd.f32 %v2106, %v2323
      %v2325 = vpop.f32.mrf.mxu0
      %2326 = vmatprep.mubr.bf16.mxu0 0
      %2327 = vmatmul.mubr.bf16.gmra.mxu0 %v2169
      %v2328 = vpop.f32.mrf.mxu0
      %v2329 = vadd.f32 %v2106, %v2328
      %v2330 = vpop.f32.mrf.mxu0
      %v2331 = vpop.f32.mrf.mxu0
      %v2332 = vadd.f32 %v2106, %v2331
      %v2333 = vpop.f32.mrf.mxu0
      %2334 = vdwg.mxu0
      %v2335 = vmul.f32 %v474, %v2209
      %v2336 = vmul.f32 %v475, %v2212
      %v2337 = vmul.f32 %v476, %v2217
      %v2338 = vmul.f32 %v477, %v2220
      %v2339 = vmul.f32 %v478, %v2225
      %v2340 = vmul.f32 %v479, %v2228
      %v2341 = vmul.f32 %v480, %v2233
      %v2342 = vmul.f32 %v481, %v2236
      %v2343 = vmul.f32 %v482, %v2241
      %v2344 = vmul.f32 %v483, %v2244
      %v2345 = vmul.f32 %v484, %v2249
      %v2346 = vmul.f32 %v485, %v2252
      %v2347 = vmul.f32 %v486, %v2257
      %v2348 = vmul.f32 %v487, %v2260
      %v2349 = vmul.f32 %v488, %v2265
      %v2350 = vmul.f32 %v489, %v2268
      %v2351 = vmul.f32 %v490, %v2273
      %v2352 = vmul.f32 %v491, %v2276
      %v2353 = vmul.f32 %v492, %v2281
      %v2354 = vmul.f32 %v493, %v2284
      %v2355 = vmul.f32 %v494, %v2289
      %v2356 = vmul.f32 %v495, %v2292
      %v2357 = vmul.f32 %v496, %v2297
      %v2358 = vmul.f32 %v497, %v2300
      %v2359 = vmul.f32 %v498, %v2305
      %v2360 = vmul.f32 %v499, %v2308
      %v2361 = vmul.f32 %v500, %v2313
      %v2362 = vmul.f32 %v501, %v2316
      %v2363 = vmul.f32 %v502, %v2321
      %v2364 = vmul.f32 %v503, %v2324
      %v2365 = vmul.f32 %v504, %v2329
      %v2366 = vmul.f32 %v505, %v2332
      %v2367 = vadd.f32 %v2335, %v2046
      %v2368 = vadd.f32 %v2336, %v2047
      %v2369 = vadd.f32 %v2337, %v2048
      %v2370 = vadd.f32 %v2338, %v2049
      %v2371 = vadd.f32 %v2339, %v2050
      %v2372 = vadd.f32 %v2340, %v2051
      %v2373 = vadd.f32 %v2341, %v2052
      %v2374 = vadd.f32 %v2342, %v2053
      %v2375 = vadd.f32 %v2343, %v2054
      %v2376 = vadd.f32 %v2344, %v2055
      %v2377 = vadd.f32 %v2345, %v2056
      %v2378 = vadd.f32 %v2346, %v2057
      %v2379 = vadd.f32 %v2347, %v2058
      %v2380 = vadd.f32 %v2348, %v2059
      %v2381 = vadd.f32 %v2349, %v2060
      %v2382 = vadd.f32 %v2350, %v2061
      %v2383 = vadd.f32 %v2351, %v2062
      %v2384 = vadd.f32 %v2352, %v2063
      %v2385 = vadd.f32 %v2353, %v2064
      %v2386 = vadd.f32 %v2354, %v2065
      %v2387 = vadd.f32 %v2355, %v2066
      %v2388 = vadd.f32 %v2356, %v2067
      %v2389 = vadd.f32 %v2357, %v2068
      %v2390 = vadd.f32 %v2358, %v2069
      %v2391 = vadd.f32 %v2359, %v2070
      %v2392 = vadd.f32 %v2360, %v2071
      %v2393 = vadd.f32 %v2361, %v2072
      %v2394 = vadd.f32 %v2362, %v2073
      %v2395 = vadd.f32 %v2363, %v2074
      %v2396 = vadd.f32 %v2364, %v2075
      %v2397 = vadd.f32 %v2365, %v2076
      %v2398 = vadd.f32 %v2366, %v2077
      %v2399 = vld [vmem:[%s9] sm:$0x1]
      %v2401 = vlaneseq
      %v2402 = vshrl.u32 %v2401, 7
      %v2403 = vsub.s32 0, %v2402
      %v2404 = vrot.slane %v2399, %v2403
      %v2406 = vmul.f32 %v2367, %v2404
      %v2407 = vmul.f32 %v2368, %v2404
      %v2408 = vmul.f32 %v2369, %v2404
      %v2409 = vmul.f32 %v2370, %v2404
      %v2410 = vmul.f32 %v2371, %v2404
      %v2411 = vmul.f32 %v2372, %v2404
      %v2412 = vmul.f32 %v2373, %v2404
      %v2413 = vmul.f32 %v2374, %v2404
      %v2414 = vmul.f32 %v2375, %v2404
      %v2415 = vmul.f32 %v2376, %v2404
      %v2416 = vmul.f32 %v2377, %v2404
      %v2417 = vmul.f32 %v2378, %v2404
      %v2418 = vmul.f32 %v2379, %v2404
      %v2419 = vmul.f32 %v2380, %v2404
      %v2420 = vmul.f32 %v2381, %v2404
      %v2421 = vmul.f32 %v2382, %v2404
      %v2422 = vmul.f32 %v2383, %v2404
      %v2423 = vmul.f32 %v2384, %v2404
      %v2424 = vmul.f32 %v2385, %v2404
      %v2425 = vmul.f32 %v2386, %v2404
      %v2426 = vmul.f32 %v2387, %v2404
      %v2427 = vmul.f32 %v2388, %v2404
      %v2428 = vmul.f32 %v2389, %v2404
      %v2429 = vmul.f32 %v2390, %v2404
      %v2430 = vmul.f32 %v2391, %v2404
      %v2431 = vmul.f32 %v2392, %v2404
      %v2432 = vmul.f32 %v2393, %v2404
      %v2433 = vmul.f32 %v2394, %v2404
      %v2434 = vmul.f32 %v2395, %v2404
      %v2435 = vmul.f32 %v2396, %v2404
      %v2436 = vmul.f32 %v2397, %v2404
      %v2437 = vmul.f32 %v2398, %v2404
      %v2438 = vsel %vm936, %v2406, 0.0
      %2439 = vadd.xlane.f32.xlu0 %v2438
      %v2440 = vpop.xlane.xlu0 %2439
      %v2441 = vsel %vm936, %v2407, 0.0
      %2442 = vadd.xlane.f32.xlu0 %v2441
      %v2443 = vpop.xlane.xlu0 %2442
      %v2444 = vsel %vm936, %v2408, 0.0
      %2445 = vadd.xlane.f32.xlu0 %v2444
      %v2446 = vpop.xlane.xlu0 %2445
      %v2447 = vsel %vm936, %v2409, 0.0
      %2448 = vadd.xlane.f32.xlu0 %v2447
      %v2449 = vpop.xlane.xlu0 %2448
      %v2450 = vsel %vm936, %v2410, 0.0
      %2451 = vadd.xlane.f32.xlu0 %v2450
      %v2452 = vpop.xlane.xlu0 %2451
      %v2453 = vsel %vm936, %v2411, 0.0
      %2454 = vadd.xlane.f32.xlu0 %v2453
      %v2455 = vpop.xlane.xlu0 %2454
      %v2456 = vsel %vm936, %v2412, 0.0
      %2457 = vadd.xlane.f32.xlu0 %v2456
      %v2458 = vpop.xlane.xlu0 %2457
      %v2459 = vsel %vm936, %v2413, 0.0
      %2460 = vadd.xlane.f32.xlu0 %v2459
      %v2461 = vpop.xlane.xlu0 %2460
      %v2462 = vsel %vm936, %v2414, 0.0
      %2463 = vadd.xlane.f32.xlu0 %v2462
      %v2464 = vpop.xlane.xlu0 %2463
      %v2465 = vsel %vm936, %v2415, 0.0
      %2466 = vadd.xlane.f32.xlu0 %v2465
      %v2467 = vpop.xlane.xlu0 %2466
      %v2468 = vsel %vm936, %v2416, 0.0
      %2469 = vadd.xlane.f32.xlu0 %v2468
      %v2470 = vpop.xlane.xlu0 %2469
      %v2471 = vsel %vm936, %v2417, 0.0
      %2472 = vadd.xlane.f32.xlu0 %v2471
      %v2473 = vpop.xlane.xlu0 %2472
      %v2474 = vsel %vm936, %v2418, 0.0
      %2475 = vadd.xlane.f32.xlu0 %v2474
      %v2476 = vpop.xlane.xlu0 %2475
      %v2477 = vsel %vm936, %v2419, 0.0
      %2478 = vadd.xlane.f32.xlu0 %v2477
      %v2479 = vpop.xlane.xlu0 %2478
      %v2480 = vsel %vm936, %v2420, 0.0
      %2481 = vadd.xlane.f32.xlu0 %v2480
      %v2482 = vpop.xlane.xlu0 %2481
      %v2483 = vsel %vm936, %v2421, 0.0
      %2484 = vadd.xlane.f32.xlu0 %v2483
      %v2485 = vpop.xlane.xlu0 %2484
      %v2486 = vsel %vm936, %v2422, 0.0
      %2487 = vadd.xlane.f32.xlu0 %v2486
      %v2488 = vpop.xlane.xlu0 %2487
      %v2489 = vsel %vm936, %v2423, 0.0
      %2490 = vadd.xlane.f32.xlu0 %v2489
      %v2491 = vpop.xlane.xlu0 %2490
      %v2492 = vsel %vm936, %v2424, 0.0
      %2493 = vadd.xlane.f32.xlu0 %v2492
      %v2494 = vpop.xlane.xlu0 %2493
      %v2495 = vsel %vm936, %v2425, 0.0
      %2496 = vadd.xlane.f32.xlu0 %v2495
      %v2497 = vpop.xlane.xlu0 %2496
      %v2498 = vsel %vm936, %v2426, 0.0
      %2499 = vadd.xlane.f32.xlu0 %v2498
      %v2500 = vpop.xlane.xlu0 %2499
      %v2501 = vsel %vm936, %v2427, 0.0
      %2502 = vadd.xlane.f32.xlu0 %v2501
      %v2503 = vpop.xlane.xlu0 %2502
      %v2504 = vsel %vm936, %v2428, 0.0
      %2505 = vadd.xlane.f32.xlu0 %v2504
      %v2506 = vpop.xlane.xlu0 %2505
      %v2507 = vsel %vm936, %v2429, 0.0
      %2508 = vadd.xlane.f32.xlu0 %v2507
      %v2509 = vpop.xlane.xlu0 %2508
      %v2510 = vsel %vm936, %v2430, 0.0
      %2511 = vadd.xlane.f32.xlu0 %v2510
      %v2512 = vpop.xlane.xlu0 %2511
      %v2513 = vsel %vm936, %v2431, 0.0
      %2514 = vadd.xlane.f32.xlu0 %v2513
      %v2515 = vpop.xlane.xlu0 %2514
      %v2516 = vsel %vm936, %v2432, 0.0
      %2517 = vadd.xlane.f32.xlu0 %v2516
      %v2518 = vpop.xlane.xlu0 %2517
      %v2519 = vsel %vm936, %v2433, 0.0
      %2520 = vadd.xlane.f32.xlu0 %v2519
      %v2521 = vpop.xlane.xlu0 %2520
      %v2522 = vsel %vm936, %v2434, 0.0
      %2523 = vadd.xlane.f32.xlu0 %v2522
      %v2524 = vpop.xlane.xlu0 %2523
      %v2525 = vsel %vm936, %v2435, 0.0
      %2526 = vadd.xlane.f32.xlu0 %v2525
      %v2527 = vpop.xlane.xlu0 %2526
      %v2528 = vsel %vm936, %v2436, 0.0
      %2529 = vadd.xlane.f32.xlu0 %v2528
      %v2530 = vpop.xlane.xlu0 %2529
      %v2531 = vsel %vm936, %v2437, 0.0
      %2532 = vadd.xlane.f32.xlu0 %v2531
      %v2533 = vpop.xlane.xlu0 %2532
      %v2534 = vld [vmem:[%s10] sm:$0x1]
      %v2536 = vlaneseq
      %v2537 = vshrl.u32 %v2536, 7
      %v2538 = vsub.s32 0, %v2537
      %v2539 = vrot.slane %v2534, %v2538
      %v2541 = vmul.f32 %v1470, %v2539
      %v2542 = vmul.f32 %v1471, %v2539
      %v2543 = vmul.f32 %v1472, %v2539
      %v2544 = vmul.f32 %v1473, %v2539
      %v2545 = vmul.f32 %v1474, %v2539
      %v2546 = vmul.f32 %v1475, %v2539
      %v2547 = vmul.f32 %v1476, %v2539
      %v2548 = vmul.f32 %v1477, %v2539
      %v2549 = vmul.f32 %v1478, %v2539
      %v2550 = vmul.f32 %v1479, %v2539
      %v2551 = vmul.f32 %v1480, %v2539
      %v2552 = vmul.f32 %v1481, %v2539
      %v2553 = vmul.f32 %v1482, %v2539
      %v2554 = vmul.f32 %v1483, %v2539
      %v2555 = vmul.f32 %v1484, %v2539
      %v2556 = vmul.f32 %v1485, %v2539
      %v2557 = vmul.f32 %v1486, %v2539
      %v2558 = vmul.f32 %v1487, %v2539
      %v2559 = vmul.f32 %v1488, %v2539
      %v2560 = vmul.f32 %v1489, %v2539
      %v2561 = vmul.f32 %v1490, %v2539
      %v2562 = vmul.f32 %v1491, %v2539
      %v2563 = vmul.f32 %v1492, %v2539
      %v2564 = vmul.f32 %v1493, %v2539
      %v2565 = vmul.f32 %v1494, %v2539
      %v2566 = vmul.f32 %v1495, %v2539
      %v2567 = vmul.f32 %v1496, %v2539
      %v2568 = vmul.f32 %v1497, %v2539
      %v2569 = vmul.f32 %v1498, %v2539
      %v2570 = vmul.f32 %v1499, %v2539
      %v2571 = vmul.f32 %v1500, %v2539
      %v2572 = vmul.f32 %v1501, %v2539
      %v2573 = vsel %vm631, %v2541, 0.0
      %2574 = vadd.xlane.f32.xlu0 %v2573
      %v2575 = vpop.xlane.xlu0 %2574
      %v2576 = vsel %vm631, %v2542, 0.0
      %2577 = vadd.xlane.f32.xlu0 %v2576
      %v2578 = vpop.xlane.xlu0 %2577
      %v2579 = vsel %vm631, %v2543, 0.0
      %2580 = vadd.xlane.f32.xlu0 %v2579
      %v2581 = vpop.xlane.xlu0 %2580
      %v2582 = vsel %vm631, %v2544, 0.0
      %2583 = vadd.xlane.f32.xlu0 %v2582
      %v2584 = vpop.xlane.xlu0 %2583
      %v2585 = vsel %vm631, %v2545, 0.0
      %2586 = vadd.xlane.f32.xlu0 %v2585
      %v2587 = vpop.xlane.xlu0 %2586
      %v2588 = vsel %vm631, %v2546, 0.0
      %2589 = vadd.xlane.f32.xlu0 %v2588
      %v2590 = vpop.xlane.xlu0 %2589
      %v2591 = vsel %vm631, %v2547, 0.0
      %2592 = vadd.xlane.f32.xlu0 %v2591
      %v2593 = vpop.xlane.xlu0 %2592
      %v2594 = vsel %vm631, %v2548, 0.0
      %2595 = vadd.xlane.f32.xlu0 %v2594
      %v2596 = vpop.xlane.xlu0 %2595
      %v2597 = vsel %vm631, %v2549, 0.0
      %2598 = vadd.xlane.f32.xlu0 %v2597
      %v2599 = vpop.xlane.xlu0 %2598
      %v2600 = vsel %vm631, %v2550, 0.0
      %2601 = vadd.xlane.f32.xlu0 %v2600
      %v2602 = vpop.xlane.xlu0 %2601
      %v2603 = vsel %vm631, %v2551, 0.0
      %2604 = vadd.xlane.f32.xlu0 %v2603
      %v2605 = vpop.xlane.xlu0 %2604
      %v2606 = vsel %vm631, %v2552, 0.0
      %2607 = vadd.xlane.f32.xlu0 %v2606
      %v2608 = vpop.xlane.xlu0 %2607
      %v2609 = vsel %vm631, %v2553, 0.0
      %2610 = vadd.xlane.f32.xlu0 %v2609
      %v2611 = vpop.xlane.xlu0 %2610
      %v2612 = vsel %vm631, %v2554, 0.0
      %2613 = vadd.xlane.f32.xlu0 %v2612
      %v2614 = vpop.xlane.xlu0 %2613
      %v2615 = vsel %vm631, %v2555, 0.0
      %2616 = vadd.xlane.f32.xlu0 %v2615
      %v2617 = vpop.xlane.xlu0 %2616
      %v2618 = vsel %vm631, %v2556, 0.0
      %2619 = vadd.xlane.f32.xlu0 %v2618
      %v2620 = vpop.xlane.xlu0 %2619
      %v2621 = vsel %vm631, %v2557, 0.0
      %2622 = vadd.xlane.f32.xlu0 %v2621
      %v2623 = vpop.xlane.xlu0 %2622
      %v2624 = vsel %vm631, %v2558, 0.0
      %2625 = vadd.xlane.f32.xlu0 %v2624
      %v2626 = vpop.xlane.xlu0 %2625
      %v2627 = vsel %vm631, %v2559, 0.0
      %2628 = vadd.xlane.f32.xlu0 %v2627
      %v2629 = vpop.xlane.xlu0 %2628
      %v2630 = vsel %vm631, %v2560, 0.0
      %2631 = vadd.xlane.f32.xlu0 %v2630
      %v2632 = vpop.xlane.xlu0 %2631
      %v2633 = vsel %vm631, %v2561, 0.0
      %2634 = vadd.xlane.f32.xlu0 %v2633
      %v2635 = vpop.xlane.xlu0 %2634
      %v2636 = vsel %vm631, %v2562, 0.0
      %2637 = vadd.xlane.f32.xlu0 %v2636
      %v2638 = vpop.xlane.xlu0 %2637
      %v2639 = vsel %vm631, %v2563, 0.0
      %2640 = vadd.xlane.f32.xlu0 %v2639
      %v2641 = vpop.xlane.xlu0 %2640
      %v2642 = vsel %vm631, %v2564, 0.0
      %2643 = vadd.xlane.f32.xlu0 %v2642
      %v2644 = vpop.xlane.xlu0 %2643
      %v2645 = vsel %vm631, %v2565, 0.0
      %2646 = vadd.xlane.f32.xlu0 %v2645
      %v2647 = vpop.xlane.xlu0 %2646
      %v2648 = vsel %vm631, %v2566, 0.0
      %2649 = vadd.xlane.f32.xlu0 %v2648
      %v2650 = vpop.xlane.xlu0 %2649
      %v2651 = vsel %vm631, %v2567, 0.0
      %2652 = vadd.xlane.f32.xlu0 %v2651
      %v2653 = vpop.xlane.xlu0 %2652
      %v2654 = vsel %vm631, %v2568, 0.0
      %2655 = vadd.xlane.f32.xlu0 %v2654
      %v2656 = vpop.xlane.xlu0 %2655
      %v2657 = vsel %vm631, %v2569, 0.0
      %2658 = vadd.xlane.f32.xlu0 %v2657
      %v2659 = vpop.xlane.xlu0 %2658
      %v2660 = vsel %vm631, %v2570, 0.0
      %2661 = vadd.xlane.f32.xlu0 %v2660
      %v2662 = vpop.xlane.xlu0 %2661
      %v2663 = vsel %vm631, %v2571, 0.0
      %2664 = vadd.xlane.f32.xlu0 %v2663
      %v2665 = vpop.xlane.xlu0 %2664
      %v2666 = vsel %vm631, %v2572, 0.0
      %2667 = vadd.xlane.f32.xlu0 %v2666
      %v2668 = vpop.xlane.xlu0 %2667
      %v2669 = vadd.f32 %v2440, %v2575
      %v2670 = vadd.f32 %v2443, %v2578
      %v2671 = vadd.f32 %v2446, %v2581
      %v2672 = vadd.f32 %v2449, %v2584
      %v2673 = vadd.f32 %v2452, %v2587
      %v2674 = vadd.f32 %v2455, %v2590
      %v2675 = vadd.f32 %v2458, %v2593
      %v2676 = vadd.f32 %v2461, %v2596
      %v2677 = vadd.f32 %v2464, %v2599
      %v2678 = vadd.f32 %v2467, %v2602
      %v2679 = vadd.f32 %v2470, %v2605
      %v2680 = vadd.f32 %v2473, %v2608
      %v2681 = vadd.f32 %v2476, %v2611
      %v2682 = vadd.f32 %v2479, %v2614
      %v2683 = vadd.f32 %v2482, %v2617
      %v2684 = vadd.f32 %v2485, %v2620
      %v2685 = vadd.f32 %v2488, %v2623
      %v2686 = vadd.f32 %v2491, %v2626
      %v2687 = vadd.f32 %v2494, %v2629
      %v2688 = vadd.f32 %v2497, %v2632
      %v2689 = vadd.f32 %v2500, %v2635
      %v2690 = vadd.f32 %v2503, %v2638
      %v2691 = vadd.f32 %v2506, %v2641
      %v2692 = vadd.f32 %v2509, %v2644
      %v2693 = vadd.f32 %v2512, %v2647
      %v2694 = vadd.f32 %v2515, %v2650
      %v2695 = vadd.f32 %v2518, %v2653
      %v2696 = vadd.f32 %v2521, %v2656
      %v2697 = vadd.f32 %v2524, %v2659
      %v2698 = vadd.f32 %v2527, %v2662
      %v2699 = vadd.f32 %v2530, %v2665
      %v2700 = vadd.f32 %v2533, %v2668
      %v2701 = vld [vmem:[#allocation2] sm:$0x1]
      %v2703 = vlaneseq
      %v2704 = vshrl.u32 %v2703, 7
      %v2705 = vsub.s32 0, %v2704
      %v2706 = vrot.slane %v2701, %v2705
      %v2708 = vadd.f32 %v2669, %v2706
      %v2709 = vadd.f32 %v2670, %v2706
      %v2710 = vadd.f32 %v2671, %v2706
      %v2711 = vadd.f32 %v2672, %v2706
      %v2712 = vadd.f32 %v2673, %v2706
      %v2713 = vadd.f32 %v2674, %v2706
      %v2714 = vadd.f32 %v2675, %v2706
      %v2715 = vadd.f32 %v2676, %v2706
      %v2716 = vadd.f32 %v2677, %v2706
      %v2717 = vadd.f32 %v2678, %v2706
      %v2718 = vadd.f32 %v2679, %v2706
      %v2719 = vadd.f32 %v2680, %v2706
      %v2720 = vadd.f32 %v2681, %v2706
      %v2721 = vadd.f32 %v2682, %v2706
      %v2722 = vadd.f32 %v2683, %v2706
      %v2723 = vadd.f32 %v2684, %v2706
      %v2724 = vadd.f32 %v2685, %v2706
      %v2725 = vadd.f32 %v2686, %v2706
      %v2726 = vadd.f32 %v2687, %v2706
      %v2727 = vadd.f32 %v2688, %v2706
      %v2728 = vadd.f32 %v2689, %v2706
      %v2729 = vadd.f32 %v2690, %v2706
      %v2730 = vadd.f32 %v2691, %v2706
      %v2731 = vadd.f32 %v2692, %v2706
      %v2732 = vadd.f32 %v2693, %v2706
      %v2733 = vadd.f32 %v2694, %v2706
      %v2734 = vadd.f32 %v2695, %v2706
      %v2735 = vadd.f32 %v2696, %v2706
      %v2736 = vadd.f32 %v2697, %v2706
      %v2737 = vadd.f32 %v2698, %v2706
      %v2738 = vadd.f32 %v2699, %v2706
      %v2739 = vadd.f32 %v2700, %v2706
      %v2740 = vxor.u32 %v2708, 2147483648
      %v2741 = vxor.u32 %v2709, 2147483648
      %v2742 = vxor.u32 %v2710, 2147483648
      %v2743 = vxor.u32 %v2711, 2147483648
      %v2744 = vxor.u32 %v2712, 2147483648
      %v2745 = vxor.u32 %v2713, 2147483648
      %v2746 = vxor.u32 %v2714, 2147483648
      %v2747 = vxor.u32 %v2715, 2147483648
      %v2748 = vxor.u32 %v2716, 2147483648
      %v2749 = vxor.u32 %v2717, 2147483648
      %v2750 = vxor.u32 %v2718, 2147483648
      %v2751 = vxor.u32 %v2719, 2147483648
      %v2752 = vxor.u32 %v2720, 2147483648
      %v2753 = vxor.u32 %v2721, 2147483648
      %v2754 = vxor.u32 %v2722, 2147483648
      %v2755 = vxor.u32 %v2723, 2147483648
      %v2756 = vxor.u32 %v2724, 2147483648
      %v2757 = vxor.u32 %v2725, 2147483648
      %v2758 = vxor.u32 %v2726, 2147483648
      %v2759 = vxor.u32 %v2727, 2147483648
      %v2760 = vxor.u32 %v2728, 2147483648
      %v2761 = vxor.u32 %v2729, 2147483648
      %v2762 = vxor.u32 %v2730, 2147483648
      %v2763 = vxor.u32 %v2731, 2147483648
      %v2764 = vxor.u32 %v2732, 2147483648
      %v2765 = vxor.u32 %v2733, 2147483648
      %v2766 = vxor.u32 %v2734, 2147483648
      %v2767 = vxor.u32 %v2735, 2147483648
      %v2768 = vxor.u32 %v2736, 2147483648
      %v2769 = vxor.u32 %v2737, 2147483648
      %v2770 = vxor.u32 %v2738, 2147483648
      %v2771 = vxor.u32 %v2739, 2147483648
      %v2772 = vmul.f32 %v2740, 1.442695
      %v2773 = vpow.pop %v2772
      %v2774 = vmul.f32 %v2741, 1.442695
      %v2775 = vpow.pop %v2774
      %v2776 = vmul.f32 %v2742, 1.442695
      %v2777 = vpow.pop %v2776
      %v2778 = vmul.f32 %v2743, 1.442695
      %v2779 = vpow.pop %v2778
      %v2780 = vmul.f32 %v2744, 1.442695
      %v2781 = vpow.pop %v2780
      %v2782 = vmul.f32 %v2745, 1.442695
      %v2783 = vpow.pop %v2782
      %v2784 = vmul.f32 %v2746, 1.442695
      %v2785 = vpow.pop %v2784
      %v2786 = vmul.f32 %v2747, 1.442695
      %v2787 = vpow.pop %v2786
      %v2788 = vmul.f32 %v2748, 1.442695
      %v2789 = vpow.pop %v2788
      %v2790 = vmul.f32 %v2749, 1.442695
      %v2791 = vpow.pop %v2790
      %v2792 = vmul.f32 %v2750, 1.442695
      %v2793 = vpow.pop %v2792
      %v2794 = vmul.f32 %v2751, 1.442695
      %v2795 = vpow.pop %v2794
      %v2796 = vmul.f32 %v2752, 1.442695
      %v2797 = vpow.pop %v2796
      %v2798 = vmul.f32 %v2753, 1.442695
      %v2799 = vpow.pop %v2798
      %v2800 = vmul.f32 %v2754, 1.442695
      %v2801 = vpow.pop %v2800
      %v2802 = vmul.f32 %v2755, 1.442695
      %v2803 = vpow.pop %v2802
      %v2804 = vmul.f32 %v2756, 1.442695
      %v2805 = vpow.pop %v2804
      %v2806 = vmul.f32 %v2757, 1.442695
      %v2807 = vpow.pop %v2806
      %v2808 = vmul.f32 %v2758, 1.442695
      %v2809 = vpow.pop %v2808
      %v2810 = vmul.f32 %v2759, 1.442695
      %v2811 = vpow.pop %v2810
      %v2812 = vmul.f32 %v2760, 1.442695
      %v2813 = vpow.pop %v2812
      %v2814 = vmul.f32 %v2761, 1.442695
      %v2815 = vpow.pop %v2814
      %v2816 = vmul.f32 %v2762, 1.442695
      %v2817 = vpow.pop %v2816
      %v2818 = vmul.f32 %v2763, 1.442695
      %v2819 = vpow.pop %v2818
      %v2820 = vmul.f32 %v2764, 1.442695
      %v2821 = vpow.pop %v2820
      %v2822 = vmul.f32 %v2765, 1.442695
      %v2823 = vpow.pop %v2822
      %v2824 = vmul.f32 %v2766, 1.442695
      %v2825 = vpow.pop %v2824
      %v2826 = vmul.f32 %v2767, 1.442695
      %v2827 = vpow.pop %v2826
      %v2828 = vmul.f32 %v2768, 1.442695
      %v2829 = vpow.pop %v2828
      %v2830 = vmul.f32 %v2769, 1.442695
      %v2831 = vpow.pop %v2830
      %v2832 = vmul.f32 %v2770, 1.442695
      %v2833 = vpow.pop %v2832
      %v2834 = vmul.f32 %v2771, 1.442695
      %v2835 = vpow.pop %v2834
      %v2836 = vadd.f32 %v2773, 1.0
      %v2837 = vadd.f32 %v2775, 1.0
      %v2838 = vadd.f32 %v2777, 1.0
      %v2839 = vadd.f32 %v2779, 1.0
      %v2840 = vadd.f32 %v2781, 1.0
      %v2841 = vadd.f32 %v2783, 1.0
      %v2842 = vadd.f32 %v2785, 1.0
      %v2843 = vadd.f32 %v2787, 1.0
      %v2844 = vadd.f32 %v2789, 1.0
      %v2845 = vadd.f32 %v2791, 1.0
      %v2846 = vadd.f32 %v2793, 1.0
      %v2847 = vadd.f32 %v2795, 1.0
      %v2848 = vadd.f32 %v2797, 1.0
      %v2849 = vadd.f32 %v2799, 1.0
      %v2850 = vadd.f32 %v2801, 1.0
      %v2851 = vadd.f32 %v2803, 1.0
      %v2852 = vadd.f32 %v2805, 1.0
      %v2853 = vadd.f32 %v2807, 1.0
      %v2854 = vadd.f32 %v2809, 1.0
      %v2855 = vadd.f32 %v2811, 1.0
      %v2856 = vadd.f32 %v2813, 1.0
      %v2857 = vadd.f32 %v2815, 1.0
      %v2858 = vadd.f32 %v2817, 1.0
      %v2859 = vadd.f32 %v2819, 1.0
      %v2860 = vadd.f32 %v2821, 1.0
      %v2861 = vadd.f32 %v2823, 1.0
      %v2862 = vadd.f32 %v2825, 1.0
      %v2863 = vadd.f32 %v2827, 1.0
      %v2864 = vadd.f32 %v2829, 1.0
      %v2865 = vadd.f32 %v2831, 1.0
      %v2866 = vadd.f32 %v2833, 1.0
      %v2867 = vadd.f32 %v2835, 1.0
      %v2868 = vrcp.pop %v2836
      %v2869 = vmul.f32 1.0, %v2868
      %v2870 = vrcp.pop %v2837
      %v2871 = vmul.f32 1.0, %v2870
      %v2872 = vrcp.pop %v2838
      %v2873 = vmul.f32 1.0, %v2872
      %v2874 = vrcp.pop %v2839
      %v2875 = vmul.f32 1.0, %v2874
      %v2876 = vrcp.pop %v2840
      %v2877 = vmul.f32 1.0, %v2876
      %v2878 = vrcp.pop %v2841
      %v2879 = vmul.f32 1.0, %v2878
      %v2880 = vrcp.pop %v2842
      %v2881 = vmul.f32 1.0, %v2880
      %v2882 = vrcp.pop %v2843
      %v2883 = vmul.f32 1.0, %v2882
      %v2884 = vrcp.pop %v2844
      %v2885 = vmul.f32 1.0, %v2884
      %v2886 = vrcp.pop %v2845
      %v2887 = vmul.f32 1.0, %v2886
      %v2888 = vrcp.pop %v2846
      %v2889 = vmul.f32 1.0, %v2888
      %v2890 = vrcp.pop %v2847
      %v2891 = vmul.f32 1.0, %v2890
      %v2892 = vrcp.pop %v2848
      %v2893 = vmul.f32 1.0, %v2892
      %v2894 = vrcp.pop %v2849
      %v2895 = vmul.f32 1.0, %v2894
      %v2896 = vrcp.pop %v2850
      %v2897 = vmul.f32 1.0, %v2896
      %v2898 = vrcp.pop %v2851
      %v2899 = vmul.f32 1.0, %v2898
      %v2900 = vrcp.pop %v2852
      %v2901 = vmul.f32 1.0, %v2900
      %v2902 = vrcp.pop %v2853
      %v2903 = vmul.f32 1.0, %v2902
      %v2904 = vrcp.pop %v2854
      %v2905 = vmul.f32 1.0, %v2904
      %v2906 = vrcp.pop %v2855
      %v2907 = vmul.f32 1.0, %v2906
      %v2908 = vrcp.pop %v2856
      %v2909 = vmul.f32 1.0, %v2908
      %v2910 = vrcp.pop %v2857
      %v2911 = vmul.f32 1.0, %v2910
      %v2912 = vrcp.pop %v2858
      %v2913 = vmul.f32 1.0, %v2912
      %v2914 = vrcp.pop %v2859
      %v2915 = vmul.f32 1.0, %v2914
      %v2916 = vrcp.pop %v2860
      %v2917 = vmul.f32 1.0, %v2916
      %v2918 = vrcp.pop %v2861
      %v2919 = vmul.f32 1.0, %v2918
      %v2920 = vrcp.pop %v2862
      %v2921 = vmul.f32 1.0, %v2920
      %v2922 = vrcp.pop %v2863
      %v2923 = vmul.f32 1.0, %v2922
      %v2924 = vrcp.pop %v2864
      %v2925 = vmul.f32 1.0, %v2924
      %v2926 = vrcp.pop %v2865
      %v2927 = vmul.f32 1.0, %v2926
      %v2928 = vrcp.pop %v2866
      %v2929 = vmul.f32 1.0, %v2928
      %v2930 = vrcp.pop %v2867
      %v2931 = vmul.f32 1.0, %v2930
      %vm2932 = vcmask 7168
      %2933 = vst.msk [vmem:[%s439] sm:$0xff] %vm2932, %v2869
      %2934 = vst.msk [vmem:[%s439 + $0x8] sm:$0xff] %vm2932, %v2871
      %2935 = vst.msk [vmem:[%s439 + $0x10] sm:$0xff] %vm2932, %v2873
      %2936 = vst.msk [vmem:[%s439 + $0x18] sm:$0xff] %vm2932, %v2875
      %2937 = vst.msk [vmem:[%s439 + $0x20] sm:$0xff] %vm2932, %v2877
      %2938 = vst.msk [vmem:[%s439 + $0x28] sm:$0xff] %vm2932, %v2879
      %2939 = vst.msk [vmem:[%s439 + $0x30] sm:$0xff] %vm2932, %v2881
      %2940 = vst.msk [vmem:[%s439 + $0x38] sm:$0xff] %vm2932, %v2883
      %2941 = vst.msk [vmem:[%s439 + $0x40] sm:$0xff] %vm2932, %v2885
      %2942 = vst.msk [vmem:[%s439 + $0x48] sm:$0xff] %vm2932, %v2887
      %2943 = vst.msk [vmem:[%s439 + $0x50] sm:$0xff] %vm2932, %v2889
      %2944 = vst.msk [vmem:[%s439 + $0x58] sm:$0xff] %vm2932, %v2891
      %2945 = vst.msk [vmem:[%s439 + $0x60] sm:$0xff] %vm2932, %v2893
      %2946 = vst.msk [vmem:[%s439 + $0x68] sm:$0xff] %vm2932, %v2895
      %2947 = vst.msk [vmem:[%s439 + $0x70] sm:$0xff] %vm2932, %v2897
      %2948 = vst.msk [vmem:[%s439 + $0x78] sm:$0xff] %vm2932, %v2899
      %2949 = vst.msk [vmem:[%s439 + $0x80] sm:$0xff] %vm2932, %v2901
      %2950 = vst.msk [vmem:[%s439 + $0x88] sm:$0xff] %vm2932, %v2903
      %2951 = vst.msk [vmem:[%s439 + $0x90] sm:$0xff] %vm2932, %v2905
      %2952 = vst.msk [vmem:[%s439 + $0x98] sm:$0xff] %vm2932, %v2907
      %2953 = vst.msk [vmem:[%s439 + $0xa0] sm:$0xff] %vm2932, %v2909
      %2954 = vst.msk [vmem:[%s439 + $0xa8] sm:$0xff] %vm2932, %v2911
      %2955 = vst.msk [vmem:[%s439 + $0xb0] sm:$0xff] %vm2932, %v2913
      %2956 = vst.msk [vmem:[%s439 + $0xb8] sm:$0xff] %vm2932, %v2915
      %2957 = vst.msk [vmem:[%s439 + $0xc0] sm:$0xff] %vm2932, %v2917
      %2958 = vst.msk [vmem:[%s439 + $0xc8] sm:$0xff] %vm2932, %v2919
      %2959 = vst.msk [vmem:[%s439 + $0xd0] sm:$0xff] %vm2932, %v2921
      %2960 = vst.msk [vmem:[%s439 + $0xd8] sm:$0xff] %vm2932, %v2923
      %2961 = vst.msk [vmem:[%s439 + $0xe0] sm:$0xff] %vm2932, %v2925
      %2962 = vst.msk [vmem:[%s439 + $0xe8] sm:$0xff] %vm2932, %v2927
      %2963 = vst.msk [vmem:[%s439 + $0xf0] sm:$0xff] %vm2932, %v2929
      %2964 = vst.msk [vmem:[%s439 + $0xf8] sm:$0xff] %vm2932, %v2931
      %s2965 = smul.u32 32, %s25
      %p2966 = scmp.lt.s32.totalorder %s2965, 63
      %s2967 = scalar_select %p2966, %s2965, 63
      %s2968 = smul.addr %s2967, 8
      %s2969 = scalar_lea.vmem %s12, %s2968
      // Predicated region
      $region69: #{tpu_custom_call.1} parent=67 // pred_check
        %p2970 = pneg %p305
      $region70: #{tpu_custom_call.1} parent=67 // pred_check_branch
        %2972 = sbr.rel (%p2970) target = $region72
      $region71: #{tpu_custom_call.1} parent=67 // pred_region
        %s2973 = smul.u32 32, %s25
      $region72: #{tpu_custom_call.1} parent=67 // pred_fallthru
        _
    $region68: #{tpu_custom_call.1} parent=5 // pred_fallthru
      _
    %p2974 = scmp.le.s32.totalorder 2, %s20
    // Predicated region
    $region73: #{tpu_custom_call.1} parent=5 // pred_check
      %p2975 = pneg %p2974
    $region74: #{tpu_custom_call.1} parent=5 // pred_check_branch
      %2977 = sbr.rel (%p2975) target = $region76
    $region75: #{tpu_custom_call.1} parent=5 // pred_region
      %s2978 = ssub.s32 %s20, 2
      // Predicated region
      $region77: #{tpu_custom_call.1} parent=75 // pred_check
        %p2979 = pneg %p311
      $region78: #{tpu_custom_call.1} parent=75 // pred_check_branch
        %2981 = sbr.rel (%p2979) target = $region80
      $region79: #{tpu_custom_call.1} parent=75 // pred_region
        %s2982 = smul.u32 32, %s26
        %p2983 = scmp.lt.s32.totalorder %s2982, 63
        %s2984 = scalar_select %p2983, %s2982, 63
        %s2985 = smul.addr %s2984, 8
        %s2986 = scalar_lea.vmem %s12, %s2985
      $region80: #{tpu_custom_call.1} parent=75 // pred_fallthru
        _
    $region76: #{tpu_custom_call.1} parent=5 // pred_fallthru
      _
  $region6: #{tpu_custom_call.1} parent=0 // loop_footer
    %s24 = sadd.s32 1, %s20
  $region7: #{tpu_custom_call.1} parent=0 // loop_footer_branch
    %19 = sbr.rel target = $region3
  $region8: #{tpu_custom_call.1} parent=0 // loop_exit
    _

</llo_original>
